<compile_context>
chip_gen: v6e
topology: v6e:2x2x1
jax: 0.10.0
libtpu: 0.0.40
codegen_flags: <defaults>
</compile_context>

<pallas_src>
import functools

import jax
import jax.numpy as jnp
from jax import lax
from jax.experimental import pallas as pl
from jax.experimental.pallas import tpu as pltpu

EPS = 1e-5               # nn.BatchNorm2d default eps
LANE = 128               # lane width / Cout padding granularity
M_TILE = 512             # M-tile (rows of the im2col matrix); fits v7x 64MiB
VMEM_LIMIT = 64 * 1024 * 1024


def _round_up(x, m):
    return (x + m - 1) // m * m


def _choose_tile(m):
    """Pick an M tile (multiple of 16 for bf16 sublanes) and the padded M."""
    if m <= M_TILE:
        tm = _round_up(m, 16)
    else:
        tm = M_TILE
    return tm, _round_up(m, tm)


# -----------------------------------------------------------------------------
# Pass A: tiled conv matmul (bf16 MXU, f32 acc) + BN batch statistics
# -----------------------------------------------------------------------------
def _conv_stats_kernel(p_ref, w_ref, out_ref, sum_ref, sq_ref):
    acc = jnp.dot(p_ref[...], w_ref[...], preferred_element_type=jnp.float32)
    out_ref[...] = acc.astype(out_ref.dtype)

    @pl.when(pl.program_id(0) == 0)
    def _():
        sum_ref[...] = jnp.zeros_like(sum_ref)
        sq_ref[...] = jnp.zeros_like(sq_ref)

    sum_ref[...] += jnp.sum(acc, axis=0, keepdims=True)
    sq_ref[...] += jnp.sum(acc * acc, axis=0, keepdims=True)


def conv_stats(patches_bf16, w_mat_bf16):
    """Returns (raw_conv (M_pad, Cp) f32, per-channel sum, per-channel sumsq)."""
    m, k = patches_bf16.shape
    cp = w_mat_bf16.shape[1]
    tm, m_pad = _choose_tile(m)
    if m_pad != m:  # zero rows contribute nothing to sum / sumsq
        patches_bf16 = jnp.pad(patches_bf16, ((0, m_pad - m), (0, 0)))
    grid = (m_pad // tm,)
    return pl.pallas_call(
        _conv_stats_kernel,
        out_shape=(
            jax.ShapeDtypeStruct((m_pad, cp), jnp.float32),
            jax.ShapeDtypeStruct((1, cp), jnp.float32),
            jax.ShapeDtypeStruct((1, cp), jnp.float32),
        ),
        grid_spec=pltpu.PrefetchScalarGridSpec(
            num_scalar_prefetch=0,
            grid=grid,
            in_specs=[
                pl.BlockSpec((tm, k), lambda i: (i, 0)),   # LHS tile over M
                pl.BlockSpec((k, cp), lambda i: (0, 0)),   # weights pinned
            ],
            out_specs=[
                pl.BlockSpec((tm, cp), lambda i: (i, 0)),  # raw conv tiles
                pl.BlockSpec((1, cp), lambda i: (0, 0)),   # grid-resident sum
                pl.BlockSpec((1, cp), lambda i: (0, 0)),   # grid-resident sumsq
            ],
        ),
        compiler_params=pltpu.CompilerParams(
            dimension_semantics=("arbitrary",),            # carries the stats acc
            vmem_limit_bytes=VMEM_LIMIT,
        ),
    )(patches_bf16, w_mat_bf16)


# -----------------------------------------------------------------------------
# Pass B: folded-BN apply (+ optional second BN branch / residual / ReLU)
# -----------------------------------------------------------------------------
def _make_apply_kernel(has_sc_bn, has_res, apply_relu):
    def kernel(*refs):
        idx = 0
        conv_ref = refs[idx]; idx += 1
        s_ref = refs[idx]; idx += 1
        t_ref = refs[idx]; idx += 1
        sc_ref = ss_ref = st_ref = res_ref = None
        if has_sc_bn:
            sc_ref, ss_ref, st_ref = refs[idx:idx + 3]
            idx += 3
        if has_res:
            res_ref = refs[idx]; idx += 1
        out_ref = refs[idx]

        y = conv_ref[...] * s_ref[...] + t_ref[...]
        if has_sc_bn:
            y = y + (sc_ref[...] * ss_ref[...] + st_ref[...])
        if has_res:
            y = y + res_ref[...].astype(jnp.float32)
        if apply_relu:
            y = jnp.maximum(y, 0.0)
        out_ref[...] = y.astype(out_ref.dtype)

    return kernel


def bn_apply(conv_raw, scale, shift, sc_raw=None, sc_scale=None, sc_shift=None,
             res=None, apply_relu=False, out_dtype=jnp.float32):
    m_pad, cp = conv_raw.shape
    tm = min(M_TILE, m_pad)
    grid = (m_pad // tm,)

    tile = pl.BlockSpec((tm, cp), lambda i: (i, 0))
    vec = pl.BlockSpec((1, cp), lambda i: (0, 0))

    inputs = [conv_raw, scale, shift]
    in_specs = [tile, vec, vec]
    if sc_raw is not None:
        inputs += [sc_raw, sc_scale, sc_shift]
        in_specs += [tile, vec, vec]
    if res is not None:
        inputs.append(res)
        in_specs.append(tile)

    kernel = _make_apply_kernel(sc_raw is not None, res is not None, apply_relu)
    return pl.pallas_call(
        kernel,
        out_shape=jax.ShapeDtypeStruct((m_pad, cp), out_dtype),
        grid_spec=pltpu.PrefetchScalarGridSpec(
            num_scalar_prefetch=0,
            grid=grid,
            in_specs=in_specs,
            out_specs=tile,
        ),
        compiler_params=pltpu.CompilerParams(
            dimension_semantics=("parallel",),
            vmem_limit_bytes=VMEM_LIMIT,
        ),
    )(*inputs)


# -----------------------------------------------------------------------------
# JAX glue: im2col, weight packing, BN folding
# -----------------------------------------------------------------------------
def im2col(x_nhwc, stride):
    """3x3 / pad=1 patch extraction. Returns ((N*Ho*Wo, 9*C), (N, Ho, Wo))."""
    n, h, w, c = x_nhwc.shape
    xp = jnp.pad(x_nhwc, ((0, 0), (1, 1), (1, 1), (0, 0)))
    ho = (h + 2 - 3) // stride + 1
    wo = (w + 2 - 3) // stride + 1
    cols = []
    for kh in range(3):
        for kw in range(3):
            cols.append(xp[:, kh:kh + stride * (ho - 1) + 1:stride,
                           kw:kw + stride * (wo - 1) + 1:stride, :])
    patches = jnp.concatenate(cols, axis=-1)          # (N, Ho, Wo, 9*C)
    return patches.reshape(n * ho * wo, 9 * c), (n, ho, wo)


def w_to_mat(w_oihw, cp):
    """PyTorch (Cout, Cin, 3, 3) -> bf16 (9*Cin, Cp) with lane-dense Cout pad."""
    cout, cin = w_oihw.shape[0], w_oihw.shape[1]
    wm = jnp.transpose(w_oihw, (2, 3, 1, 0)).reshape(9 * cin, cout)
    if cp != cout:
        wm = jnp.pad(wm, ((0, 0), (0, cp - cout)))
    return wm.astype(jnp.bfloat16)


def _pad_channels(v, cp):
    c = v.shape[0]
    if cp != c:
        v = jnp.pad(v, (0, cp - c))
    return v.reshape(1, cp).astype(jnp.float32)


def _bn_fold(sum_, sq_, gamma, beta, m_true, cp):
    """Fold batch-stats BN into per-channel scale/shift (f32, padded to Cp)."""
    mean = sum_ / m_true
    var = jnp.maximum(sq_ / m_true - mean * mean, 0.0)   # biased variance
    inv = lax.rsqrt(var + EPS)
    scale = _pad_channels(gamma, cp) * inv
    shift = _pad_channels(beta, cp) - mean * scale
    return scale, shift


# -----------------------------------------------------------------------------
# Basicblock forward
# -----------------------------------------------------------------------------
@functools.partial(jax.jit, static_argnames=("stride",))
def basicblock_forward(x_nchw, params, stride):
    x = jnp.transpose(x_nchw, (0, 2, 3, 1)).astype(jnp.float32)  # NCHW -> NHWC
    n, h, w, cin = x.shape
    planes = params["conv1_w"].shape[0]
    cp = _round_up(planes, LANE)

    # ---- conv1 -> BN1 -> ReLU ----
    p1, (_, ho, wo) = im2col(x.astype(jnp.bfloat16), stride)
    m1 = n * ho * wo
    _, m1_pad = _choose_tile(m1)
    c1_raw, s1, q1 = conv_stats(p1, w_to_mat(params["conv1_w"], cp))
    scale1, shift1 = _bn_fold(s1, q1, params["bn1_g"], params["bn1_b"], m1, cp)
    y1 = bn_apply(c1_raw, scale1, shift1, apply_relu=True,
                  out_dtype=jnp.bfloat16)
    y1_nhwc = y1[:m1, :planes].reshape(n, ho, wo, planes)

    # ---- shortcut branch ----
    if stride != 1 or cin != planes:
        # Reuse p1 (identical patches); drop sc_b: a per-channel bias right
        # before training-mode BN is cancelled exactly by the mean subtraction.
        scr_raw, ss, sq = conv_stats(p1, w_to_mat(params["sc_w"], cp))
        sc_scale, sc_shift = _bn_fold(ss, sq, params["sc_bn_g"],
                                      params["sc_bn_b"], m1, cp)
        identity = None
    else:
        scr_raw = sc_scale = sc_shift = None
        identity = jnp.pad(x.reshape(m1, cin),
                           ((0, m1_pad - m1), (0, cp - cin)))

    # ---- conv2 -> BN2 -> (+shortcut) -> ReLU ----
    p2, _ = im2col(y1_nhwc, 1)
    c2_raw, s2, q2 = conv_stats(p2, w_to_mat(params["conv2_w"], cp))
    scale2, shift2 = _bn_fold(s2, q2, params["bn2_g"], params["bn2_b"], m1, cp)
    out = bn_apply(c2_raw, scale2, shift2,
                   sc_raw=scr_raw, sc_scale=sc_scale, sc_shift=sc_shift,
                   res=identity, apply_relu=True, out_dtype=jnp.float32)
    out = out[:m1, :planes].reshape(n, ho, wo, planes)
    return jnp.transpose(out, (0, 3, 1, 2))              # NHWC -> NCHW


# -----------------------------------------------------------------------------
# Deterministic parameter init (shapes from Basicblock.__init__)
# -----------------------------------------------------------------------------
def init_params(key, in_planes, planes, stride):
    ks = jax.random.split(key, 12)
    p = {
        "conv1_w": jax.random.normal(ks[0], (planes, in_planes, 3, 3), jnp.float32) * 0.1,
        "bn1_g": jax.random.uniform(ks[1], (planes,), jnp.float32, 0.5, 1.5),
        "bn1_b": jax.random.normal(ks[2], (planes,), jnp.float32) * 0.1,
        "conv2_w": jax.random.normal(ks[3], (planes, planes, 3, 3), jnp.float32) * 0.1,
        "bn2_g": jax.random.uniform(ks[4], (planes,), jnp.float32, 0.5, 1.5),
        "bn2_b": jax.random.normal(ks[5], (planes,), jnp.float32) * 0.1,
    }
    if stride != 1 or in_planes != planes:
        p["sc_w"] = jax.random.normal(ks[6], (planes, in_planes, 3, 3), jnp.float32) * 0.1
        p["sc_b"] = jax.random.normal(ks[7], (planes,), jnp.float32) * 0.1  # cancelled by BN
        p["sc_bn_g"] = jax.random.uniform(ks[8], (planes,), jnp.float32, 0.5, 1.5)
        p["sc_bn_b"] = jax.random.normal(ks[9], (planes,), jnp.float32) * 0.1
    return p


# -----------------------------------------------------------------------------
# Pure-JAX reference (f32) for correctness check
# -----------------------------------------------------------------------------
def _conv3x3_ref(x_nhwc, w_oihw, stride, bias=None):
    w_hwio = jnp.transpose(w_oihw, (2, 3, 1, 0))
    out = lax.conv_general_dilated(
        x_nhwc, w_hwio, (stride, stride), ((1, 1), (1, 1)),
        dimension_numbers=("NHWC", "HWIO", "NHWC"),
        precision=lax.Precision.HIGHEST)
    if bias is not None:
        out = out + bias
    return out


def _bn_ref(x, gamma, beta):
    m = jnp.mean(x, axis=(0, 1, 2), keepdims=True)
    v = jnp.mean((x - m) ** 2, axis=(0, 1, 2), keepdims=True)
    return (x - m) * lax.rsqrt(v + EPS) * gamma + beta


def basicblock_ref(x_nchw, params, stride):
    x = jnp.transpose(x_nchw, (0, 2, 3, 1))
    y = jnp.maximum(_bn_ref(_conv3x3_ref(x, params["conv1_w"], stride),
                            params["bn1_g"], params["bn1_b"]), 0.0)
    y = _bn_ref(_conv3x3_ref(y, params["conv2_w"], 1),
                params["bn2_g"], params["bn2_b"])
    if "sc_w" in params:
        sc = _bn_ref(_conv3x3_ref(x, params["sc_w"], stride, params["sc_b"]),
                     params["sc_bn_g"], params["sc_bn_b"])
    else:
        sc = x
    out = jnp.maximum(y + sc, 0.0)
    return jnp.transpose(out, (0, 3, 1, 2))


if __name__ == "__main__":
    key = jax.random.PRNGKey(0)
    kx, kp = jax.random.split(key)
    x = jax.random.normal(kx, (2, 4, 16, 16), jnp.float32)   # NCHW

    configs = [
        (4, 8, 2),  # strided / channel-changing block -> conv shortcut
        (4, 4, 1),  # identity shortcut
    ]
    for in_planes, planes, stride in configs:
        params = init_params(kp, in_planes, planes, stride)
        out = basicblock_forward(x, params, stride)
        out = jax.block_until_ready(out)
        ref = basicblock_ref(x, params, stride)
        err = float(jnp.max(jnp.abs(out - ref)))
        scl = float(jnp.maximum(1.0, jnp.max(jnp.abs(ref))))
        assert out.shape == ref.shape, (out.shape, ref.shape)
        assert err < 5e-2 * scl, (
            f"max abs error {err} (ref scale {scl}) for config "
            f"{(in_planes, planes, stride)}")

    print("KERNEL_OK")
</pallas_src>

<mosaic_0001>
module attributes {stable_mosaic.version = 11 : i64} {
  func.func @_conv_stats_kernel(%arg0: i32, %arg1: memref<128x36xbf16, #tpu.memory_space<vmem>>, %arg2: memref<36x128xbf16, #tpu.memory_space<vmem>>, %arg3: memref<128x128xf32, #tpu.memory_space<vmem>>, %arg4: memref<1x128xf32, #tpu.memory_space<vmem>>, %arg5: memref<1x128xf32, #tpu.memory_space<vmem>>) attributes {dimension_semantics = [#tpu.dimension_semantics<arbitrary>], iteration_bounds = array<i64: 1>, scalar_prefetch = 0 : i64, scratch_operands = 0 : i64, tpu.core_type = #tpu.core_type<tc>, window_params = [{transform_indices = @transform_0, window_bounds = array<i64: 128, 36>}, {pipeline_mode = #tpu.pipeline_mode<synchronous>, transform_indices = @transform_1, window_bounds = array<i64: 36, 128>}, {transform_indices = @transform_2, window_bounds = array<i64: 128, 128>}, {pipeline_mode = #tpu.pipeline_mode<synchronous>, transform_indices = @transform_3, window_bounds = array<i64: 1, 128>}, {pipeline_mode = #tpu.pipeline_mode<synchronous>, transform_indices = @transform_4, window_bounds = array<i64: 1, 128>}]} {
    %c0 = arith.constant 0 : index
    %c0_0 = arith.constant 0 : index
    %0 = vector.load %arg1[%c0, %c0_0] : memref<128x36xbf16, #tpu.memory_space<vmem>>, vector<128x36xbf16>
    %c0_1 = arith.constant 0 : index
    %c0_2 = arith.constant 0 : index
    %1 = vector.load %arg2[%c0_1, %c0_2] : memref<36x128xbf16, #tpu.memory_space<vmem>>, vector<36x128xbf16>
    %cst = arith.constant dense<0.000000e+00> : vector<128x128xf32>
    %2 = tpu.matmul %0, %1, %cst {dimension_numbers = #tpu.dot_dimension_numbers<[1], [0], [0], [1], [0, 0, 1, 1], [], []>} : vector<128x36xbf16>, vector<36x128xbf16>, vector<128x128xf32> -> vector<128x128xf32>
    %c0_3 = arith.constant 0 : index
    %c0_4 = arith.constant 0 : index
    %3 = vector.load %arg3[%c0_3, %c0_4] : memref<128x128xf32, #tpu.memory_space<vmem>>, vector<128x128xf32>
    tpu.vector_store %arg3[%c0_3, %c0_4], %2 {strides = array<i32>} : memref<128x128xf32, #tpu.memory_space<vmem>>, vector<128x128xf32>,
    %c0_i32 = arith.constant 0 : i32
    %4 = arith.cmpi eq, %arg0, %c0_i32 : i32
    %5 = arith.extui %4 : i1 to i32
    %c0_i32_5 = arith.constant 0 : i32
    %6 = arith.cmpi ne, %5, %c0_i32_5 : i32
    scf.if %6 {
      %cst_16 = arith.constant 0.000000e+00 : f32
      %18 = vector.broadcast %cst_16 : f32 to vector<1x128xf32>
      %c0_17 = arith.constant 0 : index
      %c0_18 = arith.constant 0 : index
      %19 = vector.load %arg4[%c0_17, %c0_18] : memref<1x128xf32, #tpu.memory_space<vmem>>, vector<1x128xf32>
      tpu.vector_store %arg4[%c0_17, %c0_18], %18 {strides = array<i32>} : memref<1x128xf32, #tpu.memory_space<vmem>>, vector<1x128xf32>,
      %cst_19 = arith.constant 0.000000e+00 : f32
      %20 = vector.broadcast %cst_19 : f32 to vector<1x128xf32>
      %c0_20 = arith.constant 0 : index
      %c0_21 = arith.constant 0 : index
      %21 = vector.load %arg5[%c0_20, %c0_21] : memref<1x128xf32, #tpu.memory_space<vmem>>, vector<1x128xf32>
      tpu.vector_store %arg5[%c0_20, %c0_21], %20 {strides = array<i32>} : memref<1x128xf32, #tpu.memory_space<vmem>>, vector<1x128xf32>,
    } else {
    }
    %c0_6 = arith.constant 0 : index
    %c0_7 = arith.constant 0 : index
    %7 = vector.load %arg4[%c0_6, %c0_7] : memref<1x128xf32, #tpu.memory_space<vmem>>, vector<1x128xf32>
    %cst_8 = arith.constant dense<0.000000e+00> : vector<128xf32>
    %8 = vector.multi_reduction <add>, %2, %cst_8 [0] : vector<128x128xf32> to vector<128xf32>
    %9 = vector.shape_cast %8 : vector<128xf32> to vector<1x128xf32>
    %10 = arith.addf %7, %9 : vector<1x128xf32>
    %c0_9 = arith.constant 0 : index
    %c0_10 = arith.constant 0 : index
    %11 = vector.load %arg4[%c0_9, %c0_10] : memref<1x128xf32, #tpu.memory_space<vmem>>, vector<1x128xf32>
    tpu.vector_store %arg4[%c0_9, %c0_10], %10 {strides = array<i32>} : memref<1x128xf32, #tpu.memory_space<vmem>>, vector<1x128xf32>,
    %c0_11 = arith.constant 0 : index
    %c0_12 = arith.constant 0 : index
    %12 = vector.load %arg5[%c0_11, %c0_12] : memref<1x128xf32, #tpu.memory_space<vmem>>, vector<1x128xf32>
    %13 = arith.mulf %2, %2 : vector<128x128xf32>
    %cst_13 = arith.constant dense<0.000000e+00> : vector<128xf32>
    %14 = vector.multi_reduction <add>, %13, %cst_13 [0] : vector<128x128xf32> to vector<128xf32>
    %15 = vector.shape_cast %14 : vector<128xf32> to vector<1x128xf32>
    %16 = arith.addf %12, %15 : vector<1x128xf32>
    %c0_14 = arith.constant 0 : index
    %c0_15 = arith.constant 0 : index
    %17 = vector.load %arg5[%c0_14, %c0_15] : memref<1x128xf32, #tpu.memory_space<vmem>>, vector<1x128xf32>
    tpu.vector_store %arg5[%c0_14, %c0_15], %16 {strides = array<i32>} : memref<1x128xf32, #tpu.memory_space<vmem>>, vector<1x128xf32>,
    return
  }
  func.func @transform_0(%arg0: i32) -> (i32, i32) {
    %c0_i32 = arith.constant 0 : i32
    %c0_i32_0 = arith.constant 0 : i32
    return %arg0, %c0_i32 : i32, i32
  }
  func.func @transform_1(%arg0: i32) -> (i32, i32) {
    %c0_i32 = arith.constant 0 : i32
    %c0_i32_0 = arith.constant 0 : i32
    %c0_i32_1 = arith.constant 0 : i32
    return %c0_i32, %c0_i32_0 : i32, i32
  }
  func.func @transform_2(%arg0: i32) -> (i32, i32) {
    %c0_i32 = arith.constant 0 : i32
    %c0_i32_0 = arith.constant 0 : i32
    return %arg0, %c0_i32 : i32, i32
  }
  func.func @transform_3(%arg0: i32) -> (i32, i32) {
    %c0_i32 = arith.constant 0 : i32
    %c0_i32_0 = arith.constant 0 : i32
    %c0_i32_1 = arith.constant 0 : i32
    return %c0_i32, %c0_i32_0 : i32, i32
  }
  func.func @transform_4(%arg0: i32) -> (i32, i32) {
    %c0_i32 = arith.constant 0 : i32
    %c0_i32_0 = arith.constant 0 : i32
    %c0_i32_1 = arith.constant 0 : i32
    return %c0_i32, %c0_i32_0 : i32, i32
  }
}

module attributes {stable_mosaic.version = 11 : i64} {
  func.func @kernel(%arg0: i32, %arg1: memref<128x128xf32, #tpu.memory_space<vmem>>, %arg2: memref<1x128xf32, #tpu.memory_space<vmem>>, %arg3: memref<1x128xf32, #tpu.memory_space<vmem>>, %arg4: memref<128x128xbf16, #tpu.memory_space<vmem>>) attributes {dimension_semantics = [#tpu.dimension_semantics<parallel>], iteration_bounds = array<i64: 1>, scalar_prefetch = 0 : i64, scratch_operands = 0 : i64, tpu.core_type = #tpu.core_type<tc>, window_params = [{transform_indices = @transform_0, window_bounds = array<i64: 128, 128>}, {pipeline_mode = #tpu.pipeline_mode<synchronous>, transform_indices = @transform_1, window_bounds = array<i64: 1, 128>}, {pipeline_mode = #tpu.pipeline_mode<synchronous>, transform_indices = @transform_2, window_bounds = array<i64: 1, 128>}, {transform_indices = @transform_3, window_bounds = array<i64: 128, 128>}]} {
    %c0 = arith.constant 0 : index
    %c0_0 = arith.constant 0 : index
    %0 = vector.load %arg1[%c0, %c0_0] : memref<128x128xf32, #tpu.memory_space<vmem>>, vector<128x128xf32>
    %c0_1 = arith.constant 0 : index
    %c0_2 = arith.constant 0 : index
    %1 = vector.load %arg2[%c0_1, %c0_2] : memref<1x128xf32, #tpu.memory_space<vmem>>, vector<1x128xf32>
    %2 = vector.broadcast %1 : vector<1x128xf32> to vector<128x128xf32>
    %3 = arith.mulf %0, %2 : vector<128x128xf32>
    %c0_3 = arith.constant 0 : index
    %c0_4 = arith.constant 0 : index
    %4 = vector.load %arg3[%c0_3, %c0_4] : memref<1x128xf32, #tpu.memory_space<vmem>>, vector<1x128xf32>
    %5 = vector.broadcast %4 : vector<1x128xf32> to vector<128x128xf32>
    %6 = arith.addf %3, %5 : vector<128x128xf32>
    %cst = arith.constant 0.000000e+00 : f32
    %7 = vector.broadcast %cst : f32 to vector<128x128xf32>
    %8 = arith.maximumf %6, %7 : vector<128x128xf32>
    %9 = arith.truncf %8 : vector<128x128xf32> to vector<128x128xbf16>
    %c0_5 = arith.constant 0 : index
    %c0_6 = arith.constant 0 : index
    %10 = vector.load %arg4[%c0_5, %c0_6] : memref<128x128xbf16, #tpu.memory_space<vmem>>, vector<128x128xbf16>
    tpu.vector_store %arg4[%c0_5, %c0_6], %9 {strides = array<i32>} : memref<128x128xbf16, #tpu.memory_space<vmem>>, vector<128x128xbf16>,
    return
  }
  func.func @transform_0(%arg0: i32) -> (i32, i32) {
    %c0_i32 = arith.constant 0 : i32
    %c0_i32_0 = arith.constant 0 : i32
    return %arg0, %c0_i32 : i32, i32
  }
  func.func @transform_1(%arg0: i32) -> (i32, i32) {
    %c0_i32 = arith.constant 0 : i32
    %c0_i32_0 = arith.constant 0 : i32
    %c0_i32_1 = arith.constant 0 : i32
    return %c0_i32, %c0_i32_0 : i32, i32
  }
  func.func @transform_2(%arg0: i32) -> (i32, i32) {
    %c0_i32 = arith.constant 0 : i32
    %c0_i32_0 = arith.constant 0 : i32
    %c0_i32_1 = arith.constant 0 : i32
    return %c0_i32, %c0_i32_0 : i32, i32
  }
  func.func @transform_3(%arg0: i32) -> (i32, i32) {
    %c0_i32 = arith.constant 0 : i32
    %c0_i32_0 = arith.constant 0 : i32
    return %arg0, %c0_i32 : i32, i32
  }
}

module attributes {stable_mosaic.version = 11 : i64} {
  func.func @_conv_stats_kernel(%arg0: i32, %arg1: memref<128x72xbf16, #tpu.memory_space<vmem>>, %arg2: memref<72x128xbf16, #tpu.memory_space<vmem>>, %arg3: memref<128x128xf32, #tpu.memory_space<vmem>>, %arg4: memref<1x128xf32, #tpu.memory_space<vmem>>, %arg5: memref<1x128xf32, #tpu.memory_space<vmem>>) attributes {dimension_semantics = [#tpu.dimension_semantics<arbitrary>], iteration_bounds = array<i64: 1>, scalar_prefetch = 0 : i64, scratch_operands = 0 : i64, tpu.core_type = #tpu.core_type<tc>, window_params = [{transform_indices = @transform_0, window_bounds = array<i64: 128, 72>}, {pipeline_mode = #tpu.pipeline_mode<synchronous>, transform_indices = @transform_1, window_bounds = array<i64: 72, 128>}, {transform_indices = @transform_2, window_bounds = array<i64: 128, 128>}, {pipeline_mode = #tpu.pipeline_mode<synchronous>, transform_indices = @transform_3, window_bounds = array<i64: 1, 128>}, {pipeline_mode = #tpu.pipeline_mode<synchronous>, transform_indices = @transform_4, window_bounds = array<i64: 1, 128>}]} {
    %c0 = arith.constant 0 : index
    %c0_0 = arith.constant 0 : index
    %0 = vector.load %arg1[%c0, %c0_0] : memref<128x72xbf16, #tpu.memory_space<vmem>>, vector<128x72xbf16>
    %c0_1 = arith.constant 0 : index
    %c0_2 = arith.constant 0 : index
    %1 = vector.load %arg2[%c0_1, %c0_2] : memref<72x128xbf16, #tpu.memory_space<vmem>>, vector<72x128xbf16>
    %cst = arith.constant dense<0.000000e+00> : vector<128x128xf32>
    %2 = tpu.matmul %0, %1, %cst {dimension_numbers = #tpu.dot_dimension_numbers<[1], [0], [0], [1], [0, 0, 1, 1], [], []>} : vector<128x72xbf16>, vector<72x128xbf16>, vector<128x128xf32> -> vector<128x128xf32>
    %c0_3 = arith.constant 0 : index
    %c0_4 = arith.constant 0 : index
    %3 = vector.load %arg3[%c0_3, %c0_4] : memref<128x128xf32, #tpu.memory_space<vmem>>, vector<128x128xf32>
    tpu.vector_store %arg3[%c0_3, %c0_4], %2 {strides = array<i32>} : memref<128x128xf32, #tpu.memory_space<vmem>>, vector<128x128xf32>,
    %c0_i32 = arith.constant 0 : i32
    %4 = arith.cmpi eq, %arg0, %c0_i32 : i32
    %5 = arith.extui %4 : i1 to i32
    %c0_i32_5 = arith.constant 0 : i32
    %6 = arith.cmpi ne, %5, %c0_i32_5 : i32
    scf.if %6 {
      %cst_16 = arith.constant 0.000000e+00 : f32
      %18 = vector.broadcast %cst_16 : f32 to vector<1x128xf32>
      %c0_17 = arith.constant 0 : index
      %c0_18 = arith.constant 0 : index
      %19 = vector.load %arg4[%c0_17, %c0_18] : memref<1x128xf32, #tpu.memory_space<vmem>>, vector<1x128xf32>
      tpu.vector_store %arg4[%c0_17, %c0_18], %18 {strides = array<i32>} : memref<1x128xf32, #tpu.memory_space<vmem>>, vector<1x128xf32>,
      %cst_19 = arith.constant 0.000000e+00 : f32
      %20 = vector.broadcast %cst_19 : f32 to vector<1x128xf32>
      %c0_20 = arith.constant 0 : index
      %c0_21 = arith.constant 0 : index
      %21 = vector.load %arg5[%c0_20, %c0_21] : memref<1x128xf32, #tpu.memory_space<vmem>>, vector<1x128xf32>
      tpu.vector_store %arg5[%c0_20, %c0_21], %20 {strides = array<i32>} : memref<1x128xf32, #tpu.memory_space<vmem>>, vector<1x128xf32>,
    } else {
    }
    %c0_6 = arith.constant 0 : index
    %c0_7 = arith.constant 0 : index
    %7 = vector.load %arg4[%c0_6, %c0_7] : memref<1x128xf32, #tpu.memory_space<vmem>>, vector<1x128xf32>
    %cst_8 = arith.constant dense<0.000000e+00> : vector<128xf32>
    %8 = vector.multi_reduction <add>, %2, %cst_8 [0] : vector<128x128xf32> to vector<128xf32>
    %9 = vector.shape_cast %8 : vector<128xf32> to vector<1x128xf32>
    %10 = arith.addf %7, %9 : vector<1x128xf32>
    %c0_9 = arith.constant 0 : index
    %c0_10 = arith.constant 0 : index
    %11 = vector.load %arg4[%c0_9, %c0_10] : memref<1x128xf32, #tpu.memory_space<vmem>>, vector<1x128xf32>
    tpu.vector_store %arg4[%c0_9, %c0_10], %10 {strides = array<i32>} : memref<1x128xf32, #tpu.memory_space<vmem>>, vector<1x128xf32>,
    %c0_11 = arith.constant 0 : index
    %c0_12 = arith.constant 0 : index
    %12 = vector.load %arg5[%c0_11, %c0_12] : memref<1x128xf32, #tpu.memory_space<vmem>>, vector<1x128xf32>
    %13 = arith.mulf %2, %2 : vector<128x128xf32>
    %cst_13 = arith.constant dense<0.000000e+00> : vector<128xf32>
    %14 = vector.multi_reduction <add>, %13, %cst_13 [0] : vector<128x128xf32> to vector<128xf32>
    %15 = vector.shape_cast %14 : vector<128xf32> to vector<1x128xf32>
    %16 = arith.addf %12, %15 : vector<1x128xf32>
    %c0_14 = arith.constant 0 : index
    %c0_15 = arith.constant 0 : index
    %17 = vector.load %arg5[%c0_14, %c0_15] : memref<1x128xf32, #tpu.memory_space<vmem>>, vector<1x128xf32>
    tpu.vector_store %arg5[%c0_14, %c0_15], %16 {strides = array<i32>} : memref<1x128xf32, #tpu.memory_space<vmem>>, vector<1x128xf32>,
    return
  }
  func.func @transform_0(%arg0: i32) -> (i32, i32) {
    %c0_i32 = arith.constant 0 : i32
    %c0_i32_0 = arith.constant 0 : i32
    return %arg0, %c0_i32 : i32, i32
  }
  func.func @transform_1(%arg0: i32) -> (i32, i32) {
    %c0_i32 = arith.constant 0 : i32
    %c0_i32_0 = arith.constant 0 : i32
    %c0_i32_1 = arith.constant 0 : i32
    return %c0_i32, %c0_i32_0 : i32, i32
  }
  func.func @transform_2(%arg0: i32) -> (i32, i32) {
    %c0_i32 = arith.constant 0 : i32
    %c0_i32_0 = arith.constant 0 : i32
    return %arg0, %c0_i32 : i32, i32
  }
  func.func @transform_3(%arg0: i32) -> (i32, i32) {
    %c0_i32 = arith.constant 0 : i32
    %c0_i32_0 = arith.constant 0 : i32
    %c0_i32_1 = arith.constant 0 : i32
    return %c0_i32, %c0_i32_0 : i32, i32
  }
  func.func @transform_4(%arg0: i32) -> (i32, i32) {
    %c0_i32 = arith.constant 0 : i32
    %c0_i32_0 = arith.constant 0 : i32
    %c0_i32_1 = arith.constant 0 : i32
    return %c0_i32, %c0_i32_0 : i32, i32
  }
}

module attributes {stable_mosaic.version = 11 : i64} {
  func.func @kernel(%arg0: i32, %arg1: memref<128x128xf32, #tpu.memory_space<vmem>>, %arg2: memref<1x128xf32, #tpu.memory_space<vmem>>, %arg3: memref<1x128xf32, #tpu.memory_space<vmem>>, %arg4: memref<128x128xf32, #tpu.memory_space<vmem>>, %arg5: memref<1x128xf32, #tpu.memory_space<vmem>>, %arg6: memref<1x128xf32, #tpu.memory_space<vmem>>, %arg7: memref<128x128xf32, #tpu.memory_space<vmem>>) attributes {dimension_semantics = [#tpu.dimension_semantics<parallel>], iteration_bounds = array<i64: 1>, scalar_prefetch = 0 : i64, scratch_operands = 0 : i64, tpu.core_type = #tpu.core_type<tc>, window_params = [{transform_indices = @transform_0, window_bounds = array<i64: 128, 128>}, {pipeline_mode = #tpu.pipeline_mode<synchronous>, transform_indices = @transform_1, window_bounds = array<i64: 1, 128>}, {pipeline_mode = #tpu.pipeline_mode<synchronous>, transform_indices = @transform_2, window_bounds = array<i64: 1, 128>}, {transform_indices = @transform_3, window_bounds = array<i64: 128, 128>}, {pipeline_mode = #tpu.pipeline_mode<synchronous>, transform_indices = @transform_4, window_bounds = array<i64: 1, 128>}, {pipeline_mode = #tpu.pipeline_mode<synchronous>, transform_indices = @transform_5, window_bounds = array<i64: 1, 128>}, {transform_indices = @transform_6, window_bounds = array<i64: 128, 128>}]} {
    %c0 = arith.constant 0 : index
    %c0_0 = arith.constant 0 : index
    %0 = vector.load %arg1[%c0, %c0_0] : memref<128x128xf32, #tpu.memory_space<vmem>>, vector<128x128xf32>
    %c0_1 = arith.constant 0 : index
    %c0_2 = arith.constant 0 : index
    %1 = vector.load %arg2[%c0_1, %c0_2] : memref<1x128xf32, #tpu.memory_space<vmem>>, vector<1x128xf32>
    %2 = vector.broadcast %1 : vector<1x128xf32> to vector<128x128xf32>
    %3 = arith.mulf %0, %2 : vector<128x128xf32>
    %c0_3 = arith.constant 0 : index
    %c0_4 = arith.constant 0 : index
    %4 = vector.load %arg3[%c0_3, %c0_4] : memref<1x128xf32, #tpu.memory_space<vmem>>, vector<1x128xf32>
    %5 = vector.broadcast %4 : vector<1x128xf32> to vector<128x128xf32>
    %6 = arith.addf %3, %5 : vector<128x128xf32>
    %c0_5 = arith.constant 0 : index
    %c0_6 = arith.constant 0 : index
    %7 = vector.load %arg4[%c0_5, %c0_6] : memref<128x128xf32, #tpu.memory_space<vmem>>, vector<128x128xf32>
    %c0_7 = arith.constant 0 : index
    %c0_8 = arith.constant 0 : index
    %8 = vector.load %arg5[%c0_7, %c0_8] : memref<1x128xf32, #tpu.memory_space<vmem>>, vector<1x128xf32>
    %9 = vector.broadcast %8 : vector<1x128xf32> to vector<128x128xf32>
    %10 = arith.mulf %7, %9 : vector<128x128xf32>
    %c0_9 = arith.constant 0 : index
    %c0_10 = arith.constant 0 : index
    %11 = vector.load %arg6[%c0_9, %c0_10] : memref<1x128xf32, #tpu.memory_space<vmem>>, vector<1x128xf32>
    %12 = vector.broadcast %11 : vector<1x128xf32> to vector<128x128xf32>
    %13 = arith.addf %10, %12 : vector<128x128xf32>
    %14 = arith.addf %6, %13 : vector<128x128xf32>
    %cst = arith.constant 0.000000e+00 : f32
    %15 = vector.broadcast %cst : f32 to vector<128x128xf32>
    %16 = arith.maximumf %14, %15 : vector<128x128xf32>
    %c0_11 = arith.constant 0 : index
    %c0_12 = arith.constant 0 : index
    %17 = vector.load %arg7[%c0_11, %c0_12] : memref<128x128xf32, #tpu.memory_space<vmem>>, vector<128x128xf32>
    tpu.vector_store %arg7[%c0_11, %c0_12], %16 {strides = array<i32>} : memref<128x128xf32, #tpu.memory_space<vmem>>, vector<128x128xf32>,
    return
  }
  func.func @transform_0(%arg0: i32) -> (i32, i32) {
    %c0_i32 = arith.constant 0 : i32
    %c0_i32_0 = arith.constant 0 : i32
    return %arg0, %c0_i32 : i32, i32
  }
  func.func @transform_1(%arg0: i32) -> (i32, i32) {
    %c0_i32 = arith.constant 0 : i32
    %c0_i32_0 = arith.constant 0 : i32
    %c0_i32_1 = arith.constant 0 : i32
    return %c0_i32, %c0_i32_0 : i32, i32
  }
  func.func @transform_2(%arg0: i32) -> (i32, i32) {
    %c0_i32 = arith.constant 0 : i32
    %c0_i32_0 = arith.constant 0 : i32
    %c0_i32_1 = arith.constant 0 : i32
    return %c0_i32, %c0_i32_0 : i32, i32
  }
  func.func @transform_3(%arg0: i32) -> (i32, i32) {
    %c0_i32 = arith.constant 0 : i32
    %c0_i32_0 = arith.constant 0 : i32
    return %arg0, %c0_i32 : i32, i32
  }
  func.func @transform_4(%arg0: i32) -> (i32, i32) {
    %c0_i32 = arith.constant 0 : i32
    %c0_i32_0 = arith.constant 0 : i32
    %c0_i32_1 = arith.constant 0 : i32
    return %c0_i32, %c0_i32_0 : i32, i32
  }
  func.func @transform_5(%arg0: i32) -> (i32, i32) {
    %c0_i32 = arith.constant 0 : i32
    %c0_i32_0 = arith.constant 0 : i32
    %c0_i32_1 = arith.constant 0 : i32
    return %c0_i32, %c0_i32_0 : i32, i32
  }
  func.func @transform_6(%arg0: i32) -> (i32, i32) {
    %c0_i32 = arith.constant 0 : i32
    %c0_i32_0 = arith.constant 0 : i32
    return %arg0, %c0_i32 : i32, i32
  }
}

</mosaic_0001>

<llo_original>
// kernel: basicblock_forward.5
$region0: #{basicblock_forward.5}
  #allocation0 [shape = 'u32[]', space=smem, size = 0x4, offset = 0x4, fixed_abs, tag = 'smem constant byte address 0x4 - core index']
  #allocation1 [shape = 'u32[144,128]{1,0:T(1,128)}', space=vmem, size = 0x12000, scoped, tag = 'internal scratch']
  %s0 = inlined_call_operand.vmem [shape: bf16[128,36], index: 0, kind: input, shape index: {}]
  %s1 = inlined_call_operand.vmem [shape: bf16[36,128], index: 1, kind: input, shape index: {}]
  %s2 = inlined_call_operand.vmem [shape: f32[128,128], index: 2, kind: output, shape index: {0}]
  %s3 = inlined_call_operand.vmem [shape: f32[1,128], index: 3, kind: output, shape index: {1}]
  %s4 = inlined_call_operand.vmem [shape: f32[1,128], index: 4, kind: output, shape index: {2}]
  %5 = xla_tuple %s2, %s3, %s4
  %s6 = sld [smem:[#allocation0]]
  $region38: #{basicblock_forward.5} parent=0
    _
  %s8 = ssub.s32 1, %s6
  %s9 = scalar_select 0, %s8, %s6
  // Predicated region
  $region2: #{basicblock_forward.5} parent=0 // pred_check
    _
  $region3: #{basicblock_forward.5} parent=0 // pred_check_branch
    %11 = sbr.rel (0) target = $region5
  $region4: #{basicblock_forward.5} parent=0 // pred_region
    _
  $region5: #{basicblock_forward.5} parent=0 // pred_fallthru
    _
  // Predicated region
  $region6: #{basicblock_forward.5} parent=0 // pred_check
    _
  $region7: #{basicblock_forward.5} parent=0 // pred_check_branch
    %13 = sbr.rel (0) target = $region9
  $region8: #{basicblock_forward.5} parent=0 // pred_region
    _
  $region9: #{basicblock_forward.5} parent=0 // pred_fallthru
    _
  %v15 = vld [vmem:[%s0] sm:$0xf]
  %v16 = vld [vmem:[%s0 + $0x4] sm:$0xf]
  %v17 = vld [vmem:[%s0 + $0x8] sm:$0xf]
  %v18 = vld [vmem:[%s0 + $0xc] sm:$0xf]
  %v19 = vld [vmem:[%s0 + $0x10] sm:$0xf]
  %v20 = vld [vmem:[%s0 + $0x14] sm:$0xf]
  %v21 = vld [vmem:[%s0 + $0x18] sm:$0xf]
  %v22 = vld [vmem:[%s0 + $0x1c] sm:$0xf]
  %v23 = vld [vmem:[%s0 + $0x20] sm:$0xf]
  %v24 = vld [vmem:[%s0 + $0x24] sm:$0xf]
  %v25 = vld [vmem:[%s0 + $0x28] sm:$0xf]
  %v26 = vld [vmem:[%s0 + $0x2c] sm:$0xf]
  %v27 = vld [vmem:[%s0 + $0x30] sm:$0xf]
  %v28 = vld [vmem:[%s0 + $0x34] sm:$0xf]
  %v29 = vld [vmem:[%s0 + $0x38] sm:$0xf]
  %v30 = vld [vmem:[%s0 + $0x3c] sm:$0xf]
  %v31 = vld [vmem:[%s1] sm:$0xf]
  %v32 = vld [vmem:[%s1 + $0x4] sm:$0xf]
  %v33 = vld [vmem:[%s1 + $0x8] sm:$0xf]
  %v34 = vld [vmem:[%s1 + $0xc] sm:$0xf]
  %v35 = vld [vmem:[%s1 + $0x10] sm:$0x3]
  %v52 = vunpack.c.l.b16 %v15
  %v53 = vunpack.c.l.b16 %v16
  %v54 = vunpack.c.l.b16 %v17
  %v55 = vunpack.c.l.b16 %v18
  %v56 = vunpack.c.l.b16 %v19
  %v57 = vunpack.c.l.b16 %v20
  %v58 = vunpack.c.l.b16 %v21
  %v59 = vunpack.c.l.b16 %v22
  %v60 = vunpack.c.l.b16 %v23
  %v61 = vunpack.c.l.b16 %v24
  %v62 = vunpack.c.l.b16 %v25
  %v63 = vunpack.c.l.b16 %v26
  %v64 = vunpack.c.l.b16 %v27
  %v65 = vunpack.c.l.b16 %v28
  %v66 = vunpack.c.l.b16 %v29
  %v67 = vunpack.c.l.b16 %v30
  %v68 = vpack.c.b16 %v53, %v52
  %v69 = vpack.c.b16 %v55, %v54
  %v70 = vpack.c.b16 %v57, %v56
  %v71 = vpack.c.b16 %v59, %v58
  %v72 = vpack.c.b16 %v61, %v60
  %v73 = vpack.c.b16 %v63, %v62
  %v74 = vpack.c.b16 %v65, %v64
  %v75 = vpack.c.b16 %v67, %v66
  %v81 = vunpack.c.l.b16 %v31
  %v82 = vunpack.c.l.b16 %v32
  %v83 = vunpack.c.l.b16 %v33
  %v84 = vunpack.c.l.b16 %v34
  %v85 = vunpack.c.l.b16 %v35
  %v86 = vpack.c.b16 %v82, %v81
  %v87 = vpack.c.b16 %v84, %v83
  %v88 = vpack.c.b16 %v85, %v85
  %vm91 = vcmask 293888
  %v93 = vsel %vm91, %v68, 0
  %v96 = vsel %vm91, %v69, 0
  %v99 = vsel %vm91, %v70, 0
  %v102 = vsel %vm91, %v71, 0
  %v105 = vsel %vm91, %v72, 0
  %v108 = vsel %vm91, %v73, 0
  %v111 = vsel %vm91, %v74, 0
  %v114 = vsel %vm91, %v75, 0
  %vm116 = vcmask 1041408
  %v118 = vsel %vm116, %v88, 0
  %120 = vmatprep.subr.bf16.mxu0 0
  %121 = vmatpush1.bf16.msra.mxu0 0
  %122 = vmatprep.subr.bf16.mxu0 0
  %123 = vmatpush1.bf16.msra.mxu0 0
  %124 = vmatprep.subr.bf16.mxu0 0
  %125 = vmatpush1.bf16.msra.mxu0 0
  %126 = vmatprep.subr.bf16.mxu0 0
  %127 = vmatpush1.bf16.msra.mxu0 0
  %128 = vmatprep.subr.bf16.mxu0 0
  %129 = vmatpush1.bf16.msra.mxu0 0
  %130 = vmatprep.subr.bf16.mxu0 0
  %131 = vmatpush1.bf16.msra.mxu0 %v118
  %132 = vmatprep.subr.bf16.mxu0 0
  %133 = vmatpush1.bf16.msra.mxu0 %v87
  %134 = vmatprep.subr.bf16.mxu0 0
  %135 = vmatpush1.bf16.msra.mxu0 %v86
  %136 = vmatprep.subr.bf16.mxu0 0
  %137 = vmatpush2.bf16.msra.mxu0 0
  %138 = vmatprep.subr.bf16.mxu0 0
  %139 = vmatpush2.bf16.msra.mxu0 0
  %140 = vmatprep.subr.bf16.mxu0 0
  %141 = vmatpush2.bf16.msra.mxu0 0
  %142 = vmatprep.subr.bf16.mxu0 0
  %143 = vmatpush2.bf16.msra.mxu0 0
  %144 = vmatprep.subr.bf16.mxu0 0
  %145 = vmatpush2.bf16.msra.mxu0 0
  %146 = vmatprep.subr.bf16.mxu0 0
  %147 = vmatpush2.bf16.msra.mxu0 0
  %148 = vmatprep.subr.bf16.mxu0 0
  %149 = vmatpush2.bf16.msra.mxu0 0
  %150 = vmatprep.subr.bf16.mxu0 0
  %151 = vmatpush2.bf16.msra.mxu0 0
  %152 = vmatprep.mubr.bf16.mxu0 0
  %153 = vmatmul.mubr.bf16.gmra.mxu0 %v93
  %v154 = vpop.f32.mrf.mxu0
  %v155 = vadd.f32 0.0, %v154
  %v156 = vpop.f32.mrf.mxu0
  %v157 = vpop.f32.mrf.mxu0
  %v158 = vadd.f32 0.0, %v157
  %v159 = vpop.f32.mrf.mxu0
  %160 = vmatprep.mubr.bf16.mxu0 0
  %161 = vmatmul.mubr.bf16.gmra.mxu0 %v96
  %v162 = vpop.f32.mrf.mxu0
  %v163 = vadd.f32 0.0, %v162
  %v164 = vpop.f32.mrf.mxu0
  %v165 = vpop.f32.mrf.mxu0
  %v166 = vadd.f32 0.0, %v165
  %v167 = vpop.f32.mrf.mxu0
  %168 = vmatprep.mubr.bf16.mxu0 0
  %169 = vmatmul.mubr.bf16.gmra.mxu0 %v99
  %v170 = vpop.f32.mrf.mxu0
  %v171 = vadd.f32 0.0, %v170
  %v172 = vpop.f32.mrf.mxu0
  %v173 = vpop.f32.mrf.mxu0
  %v174 = vadd.f32 0.0, %v173
  %v175 = vpop.f32.mrf.mxu0
  %176 = vmatprep.mubr.bf16.mxu0 0
  %177 = vmatmul.mubr.bf16.gmra.mxu0 %v102
  %v178 = vpop.f32.mrf.mxu0
  %v179 = vadd.f32 0.0, %v178
  %v180 = vpop.f32.mrf.mxu0
  %v181 = vpop.f32.mrf.mxu0
  %v182 = vadd.f32 0.0, %v181
  %v183 = vpop.f32.mrf.mxu0
  %184 = vmatprep.mubr.bf16.mxu0 0
  %185 = vmatmul.mubr.bf16.gmra.mxu0 %v105
  %v186 = vpop.f32.mrf.mxu0
  %v187 = vadd.f32 0.0, %v186
  %v188 = vpop.f32.mrf.mxu0
  %v189 = vpop.f32.mrf.mxu0
  %v190 = vadd.f32 0.0, %v189
  %v191 = vpop.f32.mrf.mxu0
  %192 = vmatprep.mubr.bf16.mxu0 0
  %193 = vmatmul.mubr.bf16.gmra.mxu0 %v108
  %v194 = vpop.f32.mrf.mxu0
  %v195 = vadd.f32 0.0, %v194
  %v196 = vpop.f32.mrf.mxu0
  %v197 = vpop.f32.mrf.mxu0
  %v198 = vadd.f32 0.0, %v197
  %v199 = vpop.f32.mrf.mxu0
  %200 = vmatprep.mubr.bf16.mxu0 0
  %201 = vmatmul.mubr.bf16.gmra.mxu0 %v111
  %v202 = vpop.f32.mrf.mxu0
  %v203 = vadd.f32 0.0, %v202
  %v204 = vpop.f32.mrf.mxu0
  %v205 = vpop.f32.mrf.mxu0
  %v206 = vadd.f32 0.0, %v205
  %v207 = vpop.f32.mrf.mxu0
  %208 = vmatprep.mubr.bf16.mxu0 0
  %209 = vmatmul.mubr.bf16.gmra.mxu0 %v114
  %v210 = vpop.f32.mrf.mxu0
  %v211 = vadd.f32 0.0, %v210
  %v212 = vpop.f32.mrf.mxu0
  %v213 = vpop.f32.mrf.mxu0
  %v214 = vadd.f32 0.0, %v213
  %v215 = vpop.f32.mrf.mxu0
  %216 = vdwg.mxu0
  %217 = vst [vmem:[%s2] sm:$0xff] %v155
  %218 = vst [vmem:[%s2 + $0x8] sm:$0xff] %v158
  %219 = vst [vmem:[%s2 + $0x10] sm:$0xff] %v163
  %220 = vst [vmem:[%s2 + $0x18] sm:$0xff] %v166
  %221 = vst [vmem:[%s2 + $0x20] sm:$0xff] %v171
  %222 = vst [vmem:[%s2 + $0x28] sm:$0xff] %v174
  %223 = vst [vmem:[%s2 + $0x30] sm:$0xff] %v179
  %224 = vst [vmem:[%s2 + $0x38] sm:$0xff] %v182
  %225 = vst [vmem:[%s2 + $0x40] sm:$0xff] %v187
  %226 = vst [vmem:[%s2 + $0x48] sm:$0xff] %v190
  %227 = vst [vmem:[%s2 + $0x50] sm:$0xff] %v195
  %228 = vst [vmem:[%s2 + $0x58] sm:$0xff] %v198
  %229 = vst [vmem:[%s2 + $0x60] sm:$0xff] %v203
  %230 = vst [vmem:[%s2 + $0x68] sm:$0xff] %v206
  %231 = vst [vmem:[%s2 + $0x70] sm:$0xff] %v211
  %232 = vst [vmem:[%s2 + $0x78] sm:$0xff] %v214
  %p233 = scmp.eq.s32.totalorder 0, 0
  // Predicated region
  $region10: #{basicblock_forward.5} parent=0 // pred_check
    %p234 = pneg %p233
  $region11: #{basicblock_forward.5} parent=0 // pred_check_branch
    %236 = sbr.rel (%p234) target = $region13
  $region12: #{basicblock_forward.5} parent=0 // pred_region
    %237 = vst [vmem:[%s3] sm:$0x1] 0.0
    %238 = vst [vmem:[%s4] sm:$0x1] 0.0
  $region13: #{basicblock_forward.5} parent=0 // pred_fallthru
    _
  %v239 = vld [vmem:[%s3] sm:$0x1]
  %v240 = vadd.f32 %v155, %v158
  %v241 = vadd.f32 %v240, %v163
  %v242 = vadd.f32 %v241, %v166
  %v243 = vadd.f32 %v242, %v171
  %v244 = vadd.f32 %v243, %v174
  %v245 = vadd.f32 %v244, %v179
  %v246 = vadd.f32 %v245, %v182
  %v247 = vadd.f32 %v246, %v187
  %v248 = vadd.f32 %v247, %v190
  %v249 = vadd.f32 %v248, %v195
  %v250 = vadd.f32 %v249, %v198
  %v251 = vadd.f32 %v250, %v203
  %v252 = vadd.f32 %v251, %v206
  %v253 = vadd.f32 %v252, %v211
  %v254 = vadd.f32 %v253, %v214
  %v255 = vrot.slane %v254, 4
  %v256 = vadd.f32 %v254, %v255
  %v257 = vrot.slane %v256, 2
  %v258 = vadd.f32 %v256, %v257
  %v259 = vrot.slane %v258, 1
  %v260 = vadd.f32 %v258, %v259
  %v261 = vadd.f32 %v239, %v260
  %262 = vst [vmem:[%s3] sm:$0x1] %v261
  %v263 = vld [vmem:[%s4] sm:$0x1]
  %v264 = vmul.f32 %v155, %v155
  %v265 = vmul.f32 %v158, %v158
  %v266 = vmul.f32 %v163, %v163
  %v267 = vmul.f32 %v166, %v166
  %v268 = vmul.f32 %v171, %v171
  %v269 = vmul.f32 %v174, %v174
  %v270 = vmul.f32 %v179, %v179
  %v271 = vmul.f32 %v182, %v182
  %v272 = vmul.f32 %v187, %v187
  %v273 = vmul.f32 %v190, %v190
  %v274 = vmul.f32 %v195, %v195
  %v275 = vmul.f32 %v198, %v198
  %v276 = vmul.f32 %v203, %v203
  %v277 = vmul.f32 %v206, %v206
  %v278 = vmul.f32 %v211, %v211
  %v279 = vmul.f32 %v214, %v214
  %v280 = vadd.f32 %v264, %v265
  %v281 = vadd.f32 %v280, %v266
  %v282 = vadd.f32 %v281, %v267
  %v283 = vadd.f32 %v282, %v268
  %v284 = vadd.f32 %v283, %v269
  %v285 = vadd.f32 %v284, %v270
  %v286 = vadd.f32 %v285, %v271
  %v287 = vadd.f32 %v286, %v272
  %v288 = vadd.f32 %v287, %v273
  %v289 = vadd.f32 %v288, %v274
  %v290 = vadd.f32 %v289, %v275
  %v291 = vadd.f32 %v290, %v276
  %v292 = vadd.f32 %v291, %v277
  %v293 = vadd.f32 %v292, %v278
  %v294 = vadd.f32 %v293, %v279
  %v295 = vrot.slane %v294, 4
  %v296 = vadd.f32 %v294, %v295
  %v297 = vrot.slane %v296, 2
  %v298 = vadd.f32 %v296, %v297
  %v299 = vrot.slane %v298, 1
  %v300 = vadd.f32 %v298, %v299
  %v301 = vadd.f32 %v263, %v300
  %302 = vst [vmem:[%s4] sm:$0x1] %v301
  // Predicated region
  $region14: #{basicblock_forward.5} parent=0 // pred_check
    _
  $region15: #{basicblock_forward.5} parent=0 // pred_check_branch
    %304 = sbr.rel (0) target = $region17
  $region16: #{basicblock_forward.5} parent=0 // pred_region
    _
  $region17: #{basicblock_forward.5} parent=0 // pred_fallthru
    _
  // Predicated region
  $region18: #{basicblock_forward.5} parent=0 // pred_check
    _
  $region19: #{basicblock_forward.5} parent=0 // pred_check_branch
    %306 = sbr.rel (0) target = $region21
  $region20: #{basicblock_forward.5} parent=0 // pred_region
    _
  $region21: #{basicblock_forward.5} parent=0 // pred_fallthru
    _
  // Predicated region
  $region22: #{basicblock_forward.5} parent=0 // pred_check
    _
  $region23: #{basicblock_forward.5} parent=0 // pred_check_branch
    %308 = sbr.rel (0) target = $region25
  $region24: #{basicblock_forward.5} parent=0 // pred_region
    _
  $region25: #{basicblock_forward.5} parent=0 // pred_fallthru
    _
  // Predicated region
  $region26: #{basicblock_forward.5} parent=0 // pred_check
    _
  $region27: #{basicblock_forward.5} parent=0 // pred_check_branch
    %310 = sbr.rel (0) target = $region29
  $region28: #{basicblock_forward.5} parent=0 // pred_region
    _
  $region29: #{basicblock_forward.5} parent=0 // pred_fallthru
    _
  // Predicated region
  $region30: #{basicblock_forward.5} parent=0 // pred_check
    _
  $region31: #{basicblock_forward.5} parent=0 // pred_check_branch
    %312 = sbr.rel (0) target = $region33
  $region32: #{basicblock_forward.5} parent=0 // pred_region
    _
  $region33: #{basicblock_forward.5} parent=0 // pred_fallthru
    _
  // Predicated region
  $region34: #{basicblock_forward.5} parent=0 // pred_check
    _
  $region35: #{basicblock_forward.5} parent=0 // pred_check_branch
    %314 = sbr.rel (0) target = $region37
  $region36: #{basicblock_forward.5} parent=0 // pred_region
    _
  $region37: #{basicblock_forward.5} parent=0 // pred_fallthru
    _

// kernel: basicblock_forward.6
$region0: #{basicblock_forward.6}
  #allocation0 [shape = 'u32[]', space=smem, size = 0x4, offset = 0x4, fixed_abs, tag = 'smem constant byte address 0x4 - core index']
  #allocation1 [shape = 'u32[144,128]{1,0:T(1,128)}', space=vmem, size = 0x12000, scoped, tag = 'internal scratch']
  %s0 = inlined_call_operand.vmem [shape: f32[128,128], index: 0, kind: input, shape index: {}]
  %s1 = inlined_call_operand.vmem [shape: f32[1,128], index: 1, kind: input, shape index: {}]
  %s2 = inlined_call_operand.vmem [shape: f32[1,128], index: 2, kind: input, shape index: {}]
  %s3 = inlined_call_operand.vmem [shape: bf16[128,128], index: 3, kind: output, shape index: {}]
  %s4 = sld [smem:[#allocation0]]
  $region22: #{basicblock_forward.6} parent=0
    _
  %s6 = ssub.s32 1, %s4
  %s7 = scalar_select 0, %s6, %s4
  // Predicated region
  $region2: #{basicblock_forward.6} parent=0 // pred_check
    _
  $region3: #{basicblock_forward.6} parent=0 // pred_check_branch
    %9 = sbr.rel (0) target = $region5
  $region4: #{basicblock_forward.6} parent=0 // pred_region
    _
  $region5: #{basicblock_forward.6} parent=0 // pred_fallthru
    _
  // Predicated region
  $region6: #{basicblock_forward.6} parent=0 // pred_check
    _
  $region7: #{basicblock_forward.6} parent=0 // pred_check_branch
    %11 = sbr.rel (0) target = $region9
  $region8: #{basicblock_forward.6} parent=0 // pred_region
    _
  $region9: #{basicblock_forward.6} parent=0 // pred_fallthru
    _
  // Predicated region
  $region10: #{basicblock_forward.6} parent=0 // pred_check
    _
  $region11: #{basicblock_forward.6} parent=0 // pred_check_branch
    %13 = sbr.rel (0) target = $region13
  $region12: #{basicblock_forward.6} parent=0 // pred_region
    _
  $region13: #{basicblock_forward.6} parent=0 // pred_fallthru
    _
  %v14 = vld [vmem:[%s0] sm:$0xff]
  %v15 = vld [vmem:[%s0 + $0x8] sm:$0xff]
  %v16 = vld [vmem:[%s0 + $0x10] sm:$0xff]
  %v17 = vld [vmem:[%s0 + $0x18] sm:$0xff]
  %v18 = vld [vmem:[%s0 + $0x20] sm:$0xff]
  %v19 = vld [vmem:[%s0 + $0x28] sm:$0xff]
  %v20 = vld [vmem:[%s0 + $0x30] sm:$0xff]
  %v21 = vld [vmem:[%s0 + $0x38] sm:$0xff]
  %v22 = vld [vmem:[%s0 + $0x40] sm:$0xff]
  %v23 = vld [vmem:[%s0 + $0x48] sm:$0xff]
  %v24 = vld [vmem:[%s0 + $0x50] sm:$0xff]
  %v25 = vld [vmem:[%s0 + $0x58] sm:$0xff]
  %v26 = vld [vmem:[%s0 + $0x60] sm:$0xff]
  %v27 = vld [vmem:[%s0 + $0x68] sm:$0xff]
  %v28 = vld [vmem:[%s0 + $0x70] sm:$0xff]
  %v29 = vld [vmem:[%s0 + $0x78] sm:$0xff]
  %v30 = vld [vmem:[%s1] sm:$0x1]
  %v32 = vlaneseq
  %v33 = vshrl.u32 %v32, 7
  %v34 = vsub.s32 0, %v33
  %v35 = vrot.slane %v30, %v34
  %v37 = vmul.f32 %v14, %v35
  %v38 = vmul.f32 %v15, %v35
  %v39 = vmul.f32 %v16, %v35
  %v40 = vmul.f32 %v17, %v35
  %v41 = vmul.f32 %v18, %v35
  %v42 = vmul.f32 %v19, %v35
  %v43 = vmul.f32 %v20, %v35
  %v44 = vmul.f32 %v21, %v35
  %v45 = vmul.f32 %v22, %v35
  %v46 = vmul.f32 %v23, %v35
  %v47 = vmul.f32 %v24, %v35
  %v48 = vmul.f32 %v25, %v35
  %v49 = vmul.f32 %v26, %v35
  %v50 = vmul.f32 %v27, %v35
  %v51 = vmul.f32 %v28, %v35
  %v52 = vmul.f32 %v29, %v35
  %v53 = vld [vmem:[%s2] sm:$0x1]
  %v55 = vlaneseq
  %v56 = vshrl.u32 %v55, 7
  %v57 = vsub.s32 0, %v56
  %v58 = vrot.slane %v53, %v57
  %v60 = vadd.f32 %v37, %v58
  %v61 = vadd.f32 %v38, %v58
  %v62 = vadd.f32 %v39, %v58
  %v63 = vadd.f32 %v40, %v58
  %v64 = vadd.f32 %v41, %v58
  %v65 = vadd.f32 %v42, %v58
  %v66 = vadd.f32 %v43, %v58
  %v67 = vadd.f32 %v44, %v58
  %v68 = vadd.f32 %v45, %v58
  %v69 = vadd.f32 %v46, %v58
  %v70 = vadd.f32 %v47, %v58
  %v71 = vadd.f32 %v48, %v58
  %v72 = vadd.f32 %v49, %v58
  %v73 = vadd.f32 %v50, %v58
  %v74 = vadd.f32 %v51, %v58
  %v75 = vadd.f32 %v52, %v58
  %v76 = vmax.f32 %v60, 0.0
  %v77 = vmax.f32 %v61, 0.0
  %v78 = vmax.f32 %v62, 0.0
  %v79 = vmax.f32 %v63, 0.0
  %v80 = vmax.f32 %v64, 0.0
  %v81 = vmax.f32 %v65, 0.0
  %v82 = vmax.f32 %v66, 0.0
  %v83 = vmax.f32 %v67, 0.0
  %v84 = vmax.f32 %v68, 0.0
  %v85 = vmax.f32 %v69, 0.0
  %v86 = vmax.f32 %v70, 0.0
  %v87 = vmax.f32 %v71, 0.0
  %v88 = vmax.f32 %v72, 0.0
  %v89 = vmax.f32 %v73, 0.0
  %v90 = vmax.f32 %v74, 0.0
  %v91 = vmax.f32 %v75, 0.0
  %v92 = vpack.c.bf16 %v77, %v76
  %v93 = vpack.c.bf16 %v79, %v78
  %v94 = vpack.c.bf16 %v81, %v80
  %v95 = vpack.c.bf16 %v83, %v82
  %v96 = vpack.c.bf16 %v85, %v84
  %v97 = vpack.c.bf16 %v87, %v86
  %v98 = vpack.c.bf16 %v89, %v88
  %v99 = vpack.c.bf16 %v91, %v90
  %v108 = vunpack.c.l.b16 %v92
  %v109 = vunpack.c.h.b16 %v92
  %v110 = vunpack.c.l.b16 %v93
  %v111 = vunpack.c.h.b16 %v93
  %v112 = vunpack.c.l.b16 %v94
  %v113 = vunpack.c.h.b16 %v94
  %v114 = vunpack.c.l.b16 %v95
  %v115 = vunpack.c.h.b16 %v95
  %v116 = vunpack.c.l.b16 %v96
  %v117 = vunpack.c.h.b16 %v96
  %v118 = vunpack.c.l.b16 %v97
  %v119 = vunpack.c.h.b16 %v97
  %v120 = vunpack.c.l.b16 %v98
  %v121 = vunpack.c.h.b16 %v98
  %v122 = vunpack.c.l.b16 %v99
  %v123 = vunpack.c.h.b16 %v99
  %v124 = vpack.c.b16 %v108, %v108
  %v125 = vpack.c.b16 %v109, %v109
  %v126 = vpack.c.b16 %v110, %v110
  %v127 = vpack.c.b16 %v111, %v111
  %v128 = vpack.c.b16 %v112, %v112
  %v129 = vpack.c.b16 %v113, %v113
  %v130 = vpack.c.b16 %v114, %v114
  %v131 = vpack.c.b16 %v115, %v115
  %v132 = vpack.c.b16 %v116, %v116
  %v133 = vpack.c.b16 %v117, %v117
  %v134 = vpack.c.b16 %v118, %v118
  %v135 = vpack.c.b16 %v119, %v119
  %v136 = vpack.c.b16 %v120, %v120
  %v137 = vpack.c.b16 %v121, %v121
  %v138 = vpack.c.b16 %v122, %v122
  %v139 = vpack.c.b16 %v123, %v123
  %156 = vst [vmem:[%s3] sm:$0xf] %v124
  %157 = vst [vmem:[%s3 + $0x4] sm:$0xf] %v125
  %158 = vst [vmem:[%s3 + $0x8] sm:$0xf] %v126
  %159 = vst [vmem:[%s3 + $0xc] sm:$0xf] %v127
  %160 = vst [vmem:[%s3 + $0x10] sm:$0xf] %v128
  %161 = vst [vmem:[%s3 + $0x14] sm:$0xf] %v129
  %162 = vst [vmem:[%s3 + $0x18] sm:$0xf] %v130
  %163 = vst [vmem:[%s3 + $0x1c] sm:$0xf] %v131
  %164 = vst [vmem:[%s3 + $0x20] sm:$0xf] %v132
  %165 = vst [vmem:[%s3 + $0x24] sm:$0xf] %v133
  %166 = vst [vmem:[%s3 + $0x28] sm:$0xf] %v134
  %167 = vst [vmem:[%s3 + $0x2c] sm:$0xf] %v135
  %168 = vst [vmem:[%s3 + $0x30] sm:$0xf] %v136
  %169 = vst [vmem:[%s3 + $0x34] sm:$0xf] %v137
  %170 = vst [vmem:[%s3 + $0x38] sm:$0xf] %v138
  %171 = vst [vmem:[%s3 + $0x3c] sm:$0xf] %v139
  // Predicated region
  $region14: #{basicblock_forward.6} parent=0 // pred_check
    _
  $region15: #{basicblock_forward.6} parent=0 // pred_check_branch
    %173 = sbr.rel (0) target = $region17
  $region16: #{basicblock_forward.6} parent=0 // pred_region
    _
  $region17: #{basicblock_forward.6} parent=0 // pred_fallthru
    _
  // Predicated region
  $region18: #{basicblock_forward.6} parent=0 // pred_check
    _
  $region19: #{basicblock_forward.6} parent=0 // pred_check_branch
    %175 = sbr.rel (0) target = $region21
  $region20: #{basicblock_forward.6} parent=0 // pred_region
    _
  $region21: #{basicblock_forward.6} parent=0 // pred_fallthru
    _

// kernel: basicblock_forward.9
$region0: #{basicblock_forward.9}
  #allocation0 [shape = 'u32[]', space=smem, size = 0x4, offset = 0x4, fixed_abs, tag = 'smem constant byte address 0x4 - core index']
  #allocation1 [shape = 'u32[144,128]{1,0:T(1,128)}', space=vmem, size = 0x12000, scoped, tag = 'internal scratch']
  %s0 = inlined_call_operand.vmem [shape: f32[128,128], index: 0, kind: input, shape index: {}]
  %s1 = inlined_call_operand.vmem [shape: f32[1,128], index: 1, kind: input, shape index: {}]
  %s2 = inlined_call_operand.vmem [shape: f32[1,128], index: 2, kind: input, shape index: {}]
  %s3 = inlined_call_operand.vmem [shape: f32[128,128], index: 3, kind: input, shape index: {}]
  %s4 = inlined_call_operand.vmem [shape: f32[1,128], index: 4, kind: input, shape index: {}]
  %s5 = inlined_call_operand.vmem [shape: f32[1,128], index: 5, kind: input, shape index: {}]
  %s6 = inlined_call_operand.vmem [shape: f32[128,128], index: 6, kind: output, shape index: {}]
  %s7 = sld [smem:[#allocation0]]
  $region34: #{basicblock_forward.9} parent=0
    _
  %s9 = ssub.s32 1, %s7
  %s10 = scalar_select 0, %s9, %s7
  // Predicated region
  $region2: #{basicblock_forward.9} parent=0 // pred_check
    _
  $region3: #{basicblock_forward.9} parent=0 // pred_check_branch
    %12 = sbr.rel (0) target = $region5
  $region4: #{basicblock_forward.9} parent=0 // pred_region
    _
  $region5: #{basicblock_forward.9} parent=0 // pred_fallthru
    _
  // Predicated region
  $region6: #{basicblock_forward.9} parent=0 // pred_check
    _
  $region7: #{basicblock_forward.9} parent=0 // pred_check_branch
    %14 = sbr.rel (0) target = $region9
  $region8: #{basicblock_forward.9} parent=0 // pred_region
    _
  $region9: #{basicblock_forward.9} parent=0 // pred_fallthru
    _
  // Predicated region
  $region10: #{basicblock_forward.9} parent=0 // pred_check
    _
  $region11: #{basicblock_forward.9} parent=0 // pred_check_branch
    %16 = sbr.rel (0) target = $region13
  $region12: #{basicblock_forward.9} parent=0 // pred_region
    _
  $region13: #{basicblock_forward.9} parent=0 // pred_fallthru
    _
  // Predicated region
  $region14: #{basicblock_forward.9} parent=0 // pred_check
    _
  $region15: #{basicblock_forward.9} parent=0 // pred_check_branch
    %18 = sbr.rel (0) target = $region17
  $region16: #{basicblock_forward.9} parent=0 // pred_region
    _
  $region17: #{basicblock_forward.9} parent=0 // pred_fallthru
    _
  // Predicated region
  $region18: #{basicblock_forward.9} parent=0 // pred_check
    _
  $region19: #{basicblock_forward.9} parent=0 // pred_check_branch
    %20 = sbr.rel (0) target = $region21
  $region20: #{basicblock_forward.9} parent=0 // pred_region
    _
  $region21: #{basicblock_forward.9} parent=0 // pred_fallthru
    _
  // Predicated region
  $region22: #{basicblock_forward.9} parent=0 // pred_check
    _
  $region23: #{basicblock_forward.9} parent=0 // pred_check_branch
    %22 = sbr.rel (0) target = $region25
  $region24: #{basicblock_forward.9} parent=0 // pred_region
    _
  $region25: #{basicblock_forward.9} parent=0 // pred_fallthru
    _
  %v23 = vld [vmem:[%s0] sm:$0xff]
  %v24 = vld [vmem:[%s0 + $0x8] sm:$0xff]
  %v25 = vld [vmem:[%s0 + $0x10] sm:$0xff]
  %v26 = vld [vmem:[%s0 + $0x18] sm:$0xff]
  %v27 = vld [vmem:[%s0 + $0x20] sm:$0xff]
  %v28 = vld [vmem:[%s0 + $0x28] sm:$0xff]
  %v29 = vld [vmem:[%s0 + $0x30] sm:$0xff]
  %v30 = vld [vmem:[%s0 + $0x38] sm:$0xff]
  %v31 = vld [vmem:[%s0 + $0x40] sm:$0xff]
  %v32 = vld [vmem:[%s0 + $0x48] sm:$0xff]
  %v33 = vld [vmem:[%s0 + $0x50] sm:$0xff]
  %v34 = vld [vmem:[%s0 + $0x58] sm:$0xff]
  %v35 = vld [vmem:[%s0 + $0x60] sm:$0xff]
  %v36 = vld [vmem:[%s0 + $0x68] sm:$0xff]
  %v37 = vld [vmem:[%s0 + $0x70] sm:$0xff]
  %v38 = vld [vmem:[%s0 + $0x78] sm:$0xff]
  %v39 = vld [vmem:[%s1] sm:$0x1]
  %v41 = vlaneseq
  %v42 = vshrl.u32 %v41, 7
  %v43 = vsub.s32 0, %v42
  %v44 = vrot.slane %v39, %v43
  %v46 = vmul.f32 %v23, %v44
  %v47 = vmul.f32 %v24, %v44
  %v48 = vmul.f32 %v25, %v44
  %v49 = vmul.f32 %v26, %v44
  %v50 = vmul.f32 %v27, %v44
  %v51 = vmul.f32 %v28, %v44
  %v52 = vmul.f32 %v29, %v44
  %v53 = vmul.f32 %v30, %v44
  %v54 = vmul.f32 %v31, %v44
  %v55 = vmul.f32 %v32, %v44
  %v56 = vmul.f32 %v33, %v44
  %v57 = vmul.f32 %v34, %v44
  %v58 = vmul.f32 %v35, %v44
  %v59 = vmul.f32 %v36, %v44
  %v60 = vmul.f32 %v37, %v44
  %v61 = vmul.f32 %v38, %v44
  %v62 = vld [vmem:[%s2] sm:$0x1]
  %v64 = vlaneseq
  %v65 = vshrl.u32 %v64, 7
  %v66 = vsub.s32 0, %v65
  %v67 = vrot.slane %v62, %v66
  %v69 = vadd.f32 %v46, %v67
  %v70 = vadd.f32 %v47, %v67
  %v71 = vadd.f32 %v48, %v67
  %v72 = vadd.f32 %v49, %v67
  %v73 = vadd.f32 %v50, %v67
  %v74 = vadd.f32 %v51, %v67
  %v75 = vadd.f32 %v52, %v67
  %v76 = vadd.f32 %v53, %v67
  %v77 = vadd.f32 %v54, %v67
  %v78 = vadd.f32 %v55, %v67
  %v79 = vadd.f32 %v56, %v67
  %v80 = vadd.f32 %v57, %v67
  %v81 = vadd.f32 %v58, %v67
  %v82 = vadd.f32 %v59, %v67
  %v83 = vadd.f32 %v60, %v67
  %v84 = vadd.f32 %v61, %v67
  %v85 = vld [vmem:[%s3] sm:$0xff]
  %v86 = vld [vmem:[%s3 + $0x8] sm:$0xff]
  %v87 = vld [vmem:[%s3 + $0x10] sm:$0xff]
  %v88 = vld [vmem:[%s3 + $0x18] sm:$0xff]
  %v89 = vld [vmem:[%s3 + $0x20] sm:$0xff]
  %v90 = vld [vmem:[%s3 + $0x28] sm:$0xff]
  %v91 = vld [vmem:[%s3 + $0x30] sm:$0xff]
  %v92 = vld [vmem:[%s3 + $0x38] sm:$0xff]
  %v93 = vld [vmem:[%s3 + $0x40] sm:$0xff]
  %v94 = vld [vmem:[%s3 + $0x48] sm:$0xff]
  %v95 = vld [vmem:[%s3 + $0x50] sm:$0xff]
  %v96 = vld [vmem:[%s3 + $0x58] sm:$0xff]
  %v97 = vld [vmem:[%s3 + $0x60] sm:$0xff]
  %v98 = vld [vmem:[%s3 + $0x68] sm:$0xff]
  %v99 = vld [vmem:[%s3 + $0x70] sm:$0xff]
  %v100 = vld [vmem:[%s3 + $0x78] sm:$0xff]
  %v101 = vld [vmem:[%s4] sm:$0x1]
  %v103 = vlaneseq
  %v104 = vshrl.u32 %v103, 7
  %v105 = vsub.s32 0, %v104
  %v106 = vrot.slane %v101, %v105
  %v108 = vmul.f32 %v85, %v106
  %v109 = vmul.f32 %v86, %v106
  %v110 = vmul.f32 %v87, %v106
  %v111 = vmul.f32 %v88, %v106
  %v112 = vmul.f32 %v89, %v106
  %v113 = vmul.f32 %v90, %v106
  %v114 = vmul.f32 %v91, %v106
  %v115 = vmul.f32 %v92, %v106
  %v116 = vmul.f32 %v93, %v106
  %v117 = vmul.f32 %v94, %v106
  %v118 = vmul.f32 %v95, %v106
  %v119 = vmul.f32 %v96, %v106
  %v120 = vmul.f32 %v97, %v106
  %v121 = vmul.f32 %v98, %v106
  %v122 = vmul.f32 %v99, %v106
  %v123 = vmul.f32 %v100, %v106
  %v124 = vld [vmem:[%s5] sm:$0x1]
  %v126 = vlaneseq
  %v127 = vshrl.u32 %v126, 7
  %v128 = vsub.s32 0, %v127
  %v129 = vrot.slane %v124, %v128
  %v131 = vadd.f32 %v108, %v129
  %v132 = vadd.f32 %v109, %v129
  %v133 = vadd.f32 %v110, %v129
  %v134 = vadd.f32 %v111, %v129
  %v135 = vadd.f32 %v112, %v129
  %v136 = vadd.f32 %v113, %v129
  %v137 = vadd.f32 %v114, %v129
  %v138 = vadd.f32 %v115, %v129
  %v139 = vadd.f32 %v116, %v129
  %v140 = vadd.f32 %v117, %v129
  %v141 = vadd.f32 %v118, %v129
  %v142 = vadd.f32 %v119, %v129
  %v143 = vadd.f32 %v120, %v129
  %v144 = vadd.f32 %v121, %v129
  %v145 = vadd.f32 %v122, %v129
  %v146 = vadd.f32 %v123, %v129
  %v147 = vadd.f32 %v69, %v131
  %v148 = vadd.f32 %v70, %v132
  %v149 = vadd.f32 %v71, %v133
  %v150 = vadd.f32 %v72, %v134
  %v151 = vadd.f32 %v73, %v135
  %v152 = vadd.f32 %v74, %v136
  %v153 = vadd.f32 %v75, %v137
  %v154 = vadd.f32 %v76, %v138
  %v155 = vadd.f32 %v77, %v139
  %v156 = vadd.f32 %v78, %v140
  %v157 = vadd.f32 %v79, %v141
  %v158 = vadd.f32 %v80, %v142
  %v159 = vadd.f32 %v81, %v143
  %v160 = vadd.f32 %v82, %v144
  %v161 = vadd.f32 %v83, %v145
  %v162 = vadd.f32 %v84, %v146
  %v163 = vmax.f32 %v147, 0.0
  %v164 = vmax.f32 %v148, 0.0
  %v165 = vmax.f32 %v149, 0.0
  %v166 = vmax.f32 %v150, 0.0
  %v167 = vmax.f32 %v151, 0.0
  %v168 = vmax.f32 %v152, 0.0
  %v169 = vmax.f32 %v153, 0.0
  %v170 = vmax.f32 %v154, 0.0
  %v171 = vmax.f32 %v155, 0.0
  %v172 = vmax.f32 %v156, 0.0
  %v173 = vmax.f32 %v157, 0.0
  %v174 = vmax.f32 %v158, 0.0
  %v175 = vmax.f32 %v159, 0.0
  %v176 = vmax.f32 %v160, 0.0
  %v177 = vmax.f32 %v161, 0.0
  %v178 = vmax.f32 %v162, 0.0
  %179 = vst [vmem:[%s6] sm:$0xff] %v163
  %180 = vst [vmem:[%s6 + $0x8] sm:$0xff] %v164
  %181 = vst [vmem:[%s6 + $0x10] sm:$0xff] %v165
  %182 = vst [vmem:[%s6 + $0x18] sm:$0xff] %v166
  %183 = vst [vmem:[%s6 + $0x20] sm:$0xff] %v167
  %184 = vst [vmem:[%s6 + $0x28] sm:$0xff] %v168
  %185 = vst [vmem:[%s6 + $0x30] sm:$0xff] %v169
  %186 = vst [vmem:[%s6 + $0x38] sm:$0xff] %v170
  %187 = vst [vmem:[%s6 + $0x40] sm:$0xff] %v171
  %188 = vst [vmem:[%s6 + $0x48] sm:$0xff] %v172
  %189 = vst [vmem:[%s6 + $0x50] sm:$0xff] %v173
  %190 = vst [vmem:[%s6 + $0x58] sm:$0xff] %v174
  %191 = vst [vmem:[%s6 + $0x60] sm:$0xff] %v175
  %192 = vst [vmem:[%s6 + $0x68] sm:$0xff] %v176
  %193 = vst [vmem:[%s6 + $0x70] sm:$0xff] %v177
  %194 = vst [vmem:[%s6 + $0x78] sm:$0xff] %v178
  // Predicated region
  $region26: #{basicblock_forward.9} parent=0 // pred_check
    _
  $region27: #{basicblock_forward.9} parent=0 // pred_check_branch
    %196 = sbr.rel (0) target = $region29
  $region28: #{basicblock_forward.9} parent=0 // pred_region
    _
  $region29: #{basicblock_forward.9} parent=0 // pred_fallthru
    _
  // Predicated region
  $region30: #{basicblock_forward.9} parent=0 // pred_check
    _
  $region31: #{basicblock_forward.9} parent=0 // pred_check_branch
    %198 = sbr.rel (0) target = $region33
  $region32: #{basicblock_forward.9} parent=0 // pred_region
    _
  $region33: #{basicblock_forward.9} parent=0 // pred_fallthru
    _

// kernel: basicblock_forward.8
$region0: #{basicblock_forward.8}
  #allocation0 [shape = 'u32[]', space=smem, size = 0x4, offset = 0x4, fixed_abs, tag = 'smem constant byte address 0x4 - core index']
  #allocation1 [shape = 'u32[144,128]{1,0:T(1,128)}', space=vmem, size = 0x12000, scoped, tag = 'internal scratch']
  %s0 = inlined_call_operand.vmem [shape: bf16[128,72], index: 0, kind: input, shape index: {}]
  %s1 = inlined_call_operand.vmem [shape: bf16[72,128], index: 1, kind: input, shape index: {}]
  %s2 = inlined_call_operand.vmem [shape: f32[128,128], index: 2, kind: output, shape index: {0}]
  %s3 = inlined_call_operand.vmem [shape: f32[1,128], index: 3, kind: output, shape index: {1}]
  %s4 = inlined_call_operand.vmem [shape: f32[1,128], index: 4, kind: output, shape index: {2}]
  %5 = xla_tuple %s2, %s3, %s4
  %s6 = sld [smem:[#allocation0]]
  $region38: #{basicblock_forward.8} parent=0
    _
  %s8 = ssub.s32 1, %s6
  %s9 = scalar_select 0, %s8, %s6
  // Predicated region
  $region2: #{basicblock_forward.8} parent=0 // pred_check
    _
  $region3: #{basicblock_forward.8} parent=0 // pred_check_branch
    %11 = sbr.rel (0) target = $region5
  $region4: #{basicblock_forward.8} parent=0 // pred_region
    _
  $region5: #{basicblock_forward.8} parent=0 // pred_fallthru
    _
  // Predicated region
  $region6: #{basicblock_forward.8} parent=0 // pred_check
    _
  $region7: #{basicblock_forward.8} parent=0 // pred_check_branch
    %13 = sbr.rel (0) target = $region9
  $region8: #{basicblock_forward.8} parent=0 // pred_region
    _
  $region9: #{basicblock_forward.8} parent=0 // pred_fallthru
    _
  %v15 = vld [vmem:[%s0] sm:$0xf]
  %v16 = vld [vmem:[%s0 + $0x4] sm:$0xf]
  %v17 = vld [vmem:[%s0 + $0x8] sm:$0xf]
  %v18 = vld [vmem:[%s0 + $0xc] sm:$0xf]
  %v19 = vld [vmem:[%s0 + $0x10] sm:$0xf]
  %v20 = vld [vmem:[%s0 + $0x14] sm:$0xf]
  %v21 = vld [vmem:[%s0 + $0x18] sm:$0xf]
  %v22 = vld [vmem:[%s0 + $0x1c] sm:$0xf]
  %v23 = vld [vmem:[%s0 + $0x20] sm:$0xf]
  %v24 = vld [vmem:[%s0 + $0x24] sm:$0xf]
  %v25 = vld [vmem:[%s0 + $0x28] sm:$0xf]
  %v26 = vld [vmem:[%s0 + $0x2c] sm:$0xf]
  %v27 = vld [vmem:[%s0 + $0x30] sm:$0xf]
  %v28 = vld [vmem:[%s0 + $0x34] sm:$0xf]
  %v29 = vld [vmem:[%s0 + $0x38] sm:$0xf]
  %v30 = vld [vmem:[%s0 + $0x3c] sm:$0xf]
  %v31 = vld [vmem:[%s1] sm:$0xf]
  %v32 = vld [vmem:[%s1 + $0x4] sm:$0xf]
  %v33 = vld [vmem:[%s1 + $0x8] sm:$0xf]
  %v34 = vld [vmem:[%s1 + $0xc] sm:$0xf]
  %v35 = vld [vmem:[%s1 + $0x10] sm:$0xf]
  %v36 = vld [vmem:[%s1 + $0x14] sm:$0xf]
  %v37 = vld [vmem:[%s1 + $0x18] sm:$0xf]
  %v38 = vld [vmem:[%s1 + $0x1c] sm:$0xf]
  %v39 = vld [vmem:[%s1 + $0x20] sm:$0xf]
  %v56 = vunpack.c.l.b16 %v15
  %v57 = vunpack.c.l.b16 %v16
  %v58 = vunpack.c.l.b16 %v17
  %v59 = vunpack.c.l.b16 %v18
  %v60 = vunpack.c.l.b16 %v19
  %v61 = vunpack.c.l.b16 %v20
  %v62 = vunpack.c.l.b16 %v21
  %v63 = vunpack.c.l.b16 %v22
  %v64 = vunpack.c.l.b16 %v23
  %v65 = vunpack.c.l.b16 %v24
  %v66 = vunpack.c.l.b16 %v25
  %v67 = vunpack.c.l.b16 %v26
  %v68 = vunpack.c.l.b16 %v27
  %v69 = vunpack.c.l.b16 %v28
  %v70 = vunpack.c.l.b16 %v29
  %v71 = vunpack.c.l.b16 %v30
  %v72 = vpack.c.b16 %v57, %v56
  %v73 = vpack.c.b16 %v59, %v58
  %v74 = vpack.c.b16 %v61, %v60
  %v75 = vpack.c.b16 %v63, %v62
  %v76 = vpack.c.b16 %v65, %v64
  %v77 = vpack.c.b16 %v67, %v66
  %v78 = vpack.c.b16 %v69, %v68
  %v79 = vpack.c.b16 %v71, %v70
  %v89 = vunpack.c.l.b16 %v31
  %v90 = vunpack.c.l.b16 %v32
  %v91 = vunpack.c.l.b16 %v33
  %v92 = vunpack.c.l.b16 %v34
  %v93 = vunpack.c.l.b16 %v35
  %v94 = vunpack.c.l.b16 %v36
  %v95 = vunpack.c.l.b16 %v37
  %v96 = vunpack.c.l.b16 %v38
  %v97 = vunpack.c.l.b16 %v39
  %v98 = vpack.c.b16 %v90, %v89
  %v99 = vpack.c.b16 %v92, %v91
  %v100 = vpack.c.b16 %v94, %v93
  %v101 = vpack.c.b16 %v96, %v95
  %v102 = vpack.c.b16 %v97, %v97
  %vm107 = vcmask 588800
  %v109 = vsel %vm107, %v72, 0
  %v112 = vsel %vm107, %v73, 0
  %v115 = vsel %vm107, %v74, 0
  %v118 = vsel %vm107, %v75, 0
  %v121 = vsel %vm107, %v76, 0
  %v124 = vsel %vm107, %v77, 0
  %v127 = vsel %vm107, %v78, 0
  %v130 = vsel %vm107, %v79, 0
  %vm132 = vcmask 1043456
  %v134 = vsel %vm132, %v102, 0
  %136 = vmatprep.subr.bf16.mxu0 0
  %137 = vmatpush1.bf16.msra.mxu0 0
  %138 = vmatprep.subr.bf16.mxu0 0
  %139 = vmatpush1.bf16.msra.mxu0 0
  %140 = vmatprep.subr.bf16.mxu0 0
  %141 = vmatpush1.bf16.msra.mxu0 0
  %142 = vmatprep.subr.bf16.mxu0 0
  %143 = vmatpush1.bf16.msra.mxu0 %v134
  %144 = vmatprep.subr.bf16.mxu0 0
  %145 = vmatpush1.bf16.msra.mxu0 %v101
  %146 = vmatprep.subr.bf16.mxu0 0
  %147 = vmatpush1.bf16.msra.mxu0 %v100
  %148 = vmatprep.subr.bf16.mxu0 0
  %149 = vmatpush1.bf16.msra.mxu0 %v99
  %150 = vmatprep.subr.bf16.mxu0 0
  %151 = vmatpush1.bf16.msra.mxu0 %v98
  %152 = vmatprep.subr.bf16.mxu0 0
  %153 = vmatpush2.bf16.msra.mxu0 0
  %154 = vmatprep.subr.bf16.mxu0 0
  %155 = vmatpush2.bf16.msra.mxu0 0
  %156 = vmatprep.subr.bf16.mxu0 0
  %157 = vmatpush2.bf16.msra.mxu0 0
  %158 = vmatprep.subr.bf16.mxu0 0
  %159 = vmatpush2.bf16.msra.mxu0 0
  %160 = vmatprep.subr.bf16.mxu0 0
  %161 = vmatpush2.bf16.msra.mxu0 0
  %162 = vmatprep.subr.bf16.mxu0 0
  %163 = vmatpush2.bf16.msra.mxu0 0
  %164 = vmatprep.subr.bf16.mxu0 0
  %165 = vmatpush2.bf16.msra.mxu0 0
  %166 = vmatprep.subr.bf16.mxu0 0
  %167 = vmatpush2.bf16.msra.mxu0 0
  %168 = vmatprep.mubr.bf16.mxu0 0
  %169 = vmatmul.mubr.bf16.gmra.mxu0 %v109
  %v170 = vpop.f32.mrf.mxu0
  %v171 = vadd.f32 0.0, %v170
  %v172 = vpop.f32.mrf.mxu0
  %v173 = vpop.f32.mrf.mxu0
  %v174 = vadd.f32 0.0, %v173
  %v175 = vpop.f32.mrf.mxu0
  %176 = vmatprep.mubr.bf16.mxu0 0
  %177 = vmatmul.mubr.bf16.gmra.mxu0 %v112
  %v178 = vpop.f32.mrf.mxu0
  %v179 = vadd.f32 0.0, %v178
  %v180 = vpop.f32.mrf.mxu0
  %v181 = vpop.f32.mrf.mxu0
  %v182 = vadd.f32 0.0, %v181
  %v183 = vpop.f32.mrf.mxu0
  %184 = vmatprep.mubr.bf16.mxu0 0
  %185 = vmatmul.mubr.bf16.gmra.mxu0 %v115
  %v186 = vpop.f32.mrf.mxu0
  %v187 = vadd.f32 0.0, %v186
  %v188 = vpop.f32.mrf.mxu0
  %v189 = vpop.f32.mrf.mxu0
  %v190 = vadd.f32 0.0, %v189
  %v191 = vpop.f32.mrf.mxu0
  %192 = vmatprep.mubr.bf16.mxu0 0
  %193 = vmatmul.mubr.bf16.gmra.mxu0 %v118
  %v194 = vpop.f32.mrf.mxu0
  %v195 = vadd.f32 0.0, %v194
  %v196 = vpop.f32.mrf.mxu0
  %v197 = vpop.f32.mrf.mxu0
  %v198 = vadd.f32 0.0, %v197
  %v199 = vpop.f32.mrf.mxu0
  %200 = vmatprep.mubr.bf16.mxu0 0
  %201 = vmatmul.mubr.bf16.gmra.mxu0 %v121
  %v202 = vpop.f32.mrf.mxu0
  %v203 = vadd.f32 0.0, %v202
  %v204 = vpop.f32.mrf.mxu0
  %v205 = vpop.f32.mrf.mxu0
  %v206 = vadd.f32 0.0, %v205
  %v207 = vpop.f32.mrf.mxu0
  %208 = vmatprep.mubr.bf16.mxu0 0
  %209 = vmatmul.mubr.bf16.gmra.mxu0 %v124
  %v210 = vpop.f32.mrf.mxu0
  %v211 = vadd.f32 0.0, %v210
  %v212 = vpop.f32.mrf.mxu0
  %v213 = vpop.f32.mrf.mxu0
  %v214 = vadd.f32 0.0, %v213
  %v215 = vpop.f32.mrf.mxu0
  %216 = vmatprep.mubr.bf16.mxu0 0
  %217 = vmatmul.mubr.bf16.gmra.mxu0 %v127
  %v218 = vpop.f32.mrf.mxu0
  %v219 = vadd.f32 0.0, %v218
  %v220 = vpop.f32.mrf.mxu0
  %v221 = vpop.f32.mrf.mxu0
  %v222 = vadd.f32 0.0, %v221
  %v223 = vpop.f32.mrf.mxu0
  %224 = vmatprep.mubr.bf16.mxu0 0
  %225 = vmatmul.mubr.bf16.gmra.mxu0 %v130
  %v226 = vpop.f32.mrf.mxu0
  %v227 = vadd.f32 0.0, %v226
  %v228 = vpop.f32.mrf.mxu0
  %v229 = vpop.f32.mrf.mxu0
  %v230 = vadd.f32 0.0, %v229
  %v231 = vpop.f32.mrf.mxu0
  %232 = vdwg.mxu0
  %233 = vst [vmem:[%s2] sm:$0xff] %v171
  %234 = vst [vmem:[%s2 + $0x8] sm:$0xff] %v174
  %235 = vst [vmem:[%s2 + $0x10] sm:$0xff] %v179
  %236 = vst [vmem:[%s2 + $0x18] sm:$0xff] %v182
  %237 = vst [vmem:[%s2 + $0x20] sm:$0xff] %v187
  %238 = vst [vmem:[%s2 + $0x28] sm:$0xff] %v190
  %239 = vst [vmem:[%s2 + $0x30] sm:$0xff] %v195
  %240 = vst [vmem:[%s2 + $0x38] sm:$0xff] %v198
  %241 = vst [vmem:[%s2 + $0x40] sm:$0xff] %v203
  %242 = vst [vmem:[%s2 + $0x48] sm:$0xff] %v206
  %243 = vst [vmem:[%s2 + $0x50] sm:$0xff] %v211
  %244 = vst [vmem:[%s2 + $0x58] sm:$0xff] %v214
  %245 = vst [vmem:[%s2 + $0x60] sm:$0xff] %v219
  %246 = vst [vmem:[%s2 + $0x68] sm:$0xff] %v222
  %247 = vst [vmem:[%s2 + $0x70] sm:$0xff] %v227
  %248 = vst [vmem:[%s2 + $0x78] sm:$0xff] %v230
  %p249 = scmp.eq.s32.totalorder 0, 0
  // Predicated region
  $region10: #{basicblock_forward.8} parent=0 // pred_check
    %p250 = pneg %p249
  $region11: #{basicblock_forward.8} parent=0 // pred_check_branch
    %252 = sbr.rel (%p250) target = $region13
  $region12: #{basicblock_forward.8} parent=0 // pred_region
    %253 = vst [vmem:[%s3] sm:$0x1] 0.0
    %254 = vst [vmem:[%s4] sm:$0x1] 0.0
  $region13: #{basicblock_forward.8} parent=0 // pred_fallthru
    _
  %v255 = vld [vmem:[%s3] sm:$0x1]
  %v256 = vadd.f32 %v171, %v174
  %v257 = vadd.f32 %v256, %v179
  %v258 = vadd.f32 %v257, %v182
  %v259 = vadd.f32 %v258, %v187
  %v260 = vadd.f32 %v259, %v190
  %v261 = vadd.f32 %v260, %v195
  %v262 = vadd.f32 %v261, %v198
  %v263 = vadd.f32 %v262, %v203
  %v264 = vadd.f32 %v263, %v206
  %v265 = vadd.f32 %v264, %v211
  %v266 = vadd.f32 %v265, %v214
  %v267 = vadd.f32 %v266, %v219
  %v268 = vadd.f32 %v267, %v222
  %v269 = vadd.f32 %v268, %v227
  %v270 = vadd.f32 %v269, %v230
  %v271 = vrot.slane %v270, 4
  %v272 = vadd.f32 %v270, %v271
  %v273 = vrot.slane %v272, 2
  %v274 = vadd.f32 %v272, %v273
  %v275 = vrot.slane %v274, 1
  %v276 = vadd.f32 %v274, %v275
  %v277 = vadd.f32 %v255, %v276
  %278 = vst [vmem:[%s3] sm:$0x1] %v277
  %v279 = vld [vmem:[%s4] sm:$0x1]
  %v280 = vmul.f32 %v171, %v171
  %v281 = vmul.f32 %v174, %v174
  %v282 = vmul.f32 %v179, %v179
  %v283 = vmul.f32 %v182, %v182
  %v284 = vmul.f32 %v187, %v187
  %v285 = vmul.f32 %v190, %v190
  %v286 = vmul.f32 %v195, %v195
  %v287 = vmul.f32 %v198, %v198
  %v288 = vmul.f32 %v203, %v203
  %v289 = vmul.f32 %v206, %v206
  %v290 = vmul.f32 %v211, %v211
  %v291 = vmul.f32 %v214, %v214
  %v292 = vmul.f32 %v219, %v219
  %v293 = vmul.f32 %v222, %v222
  %v294 = vmul.f32 %v227, %v227
  %v295 = vmul.f32 %v230, %v230
  %v296 = vadd.f32 %v280, %v281
  %v297 = vadd.f32 %v296, %v282
  %v298 = vadd.f32 %v297, %v283
  %v299 = vadd.f32 %v298, %v284
  %v300 = vadd.f32 %v299, %v285
  %v301 = vadd.f32 %v300, %v286
  %v302 = vadd.f32 %v301, %v287
  %v303 = vadd.f32 %v302, %v288
  %v304 = vadd.f32 %v303, %v289
  %v305 = vadd.f32 %v304, %v290
  %v306 = vadd.f32 %v305, %v291
  %v307 = vadd.f32 %v306, %v292
  %v308 = vadd.f32 %v307, %v293
  %v309 = vadd.f32 %v308, %v294
  %v310 = vadd.f32 %v309, %v295
  %v311 = vrot.slane %v310, 4
  %v312 = vadd.f32 %v310, %v311
  %v313 = vrot.slane %v312, 2
  %v314 = vadd.f32 %v312, %v313
  %v315 = vrot.slane %v314, 1
  %v316 = vadd.f32 %v314, %v315
  %v317 = vadd.f32 %v279, %v316
  %318 = vst [vmem:[%s4] sm:$0x1] %v317
  // Predicated region
  $region14: #{basicblock_forward.8} parent=0 // pred_check
    _
  $region15: #{basicblock_forward.8} parent=0 // pred_check_branch
    %320 = sbr.rel (0) target = $region17
  $region16: #{basicblock_forward.8} parent=0 // pred_region
    _
  $region17: #{basicblock_forward.8} parent=0 // pred_fallthru
    _
  // Predicated region
  $region18: #{basicblock_forward.8} parent=0 // pred_check
    _
  $region19: #{basicblock_forward.8} parent=0 // pred_check_branch
    %322 = sbr.rel (0) target = $region21
  $region20: #{basicblock_forward.8} parent=0 // pred_region
    _
  $region21: #{basicblock_forward.8} parent=0 // pred_fallthru
    _
  // Predicated region
  $region22: #{basicblock_forward.8} parent=0 // pred_check
    _
  $region23: #{basicblock_forward.8} parent=0 // pred_check_branch
    %324 = sbr.rel (0) target = $region25
  $region24: #{basicblock_forward.8} parent=0 // pred_region
    _
  $region25: #{basicblock_forward.8} parent=0 // pred_fallthru
    _
  // Predicated region
  $region26: #{basicblock_forward.8} parent=0 // pred_check
    _
  $region27: #{basicblock_forward.8} parent=0 // pred_check_branch
    %326 = sbr.rel (0) target = $region29
  $region28: #{basicblock_forward.8} parent=0 // pred_region
    _
  $region29: #{basicblock_forward.8} parent=0 // pred_fallthru
    _
  // Predicated region
  $region30: #{basicblock_forward.8} parent=0 // pred_check
    _
  $region31: #{basicblock_forward.8} parent=0 // pred_check_branch
    %328 = sbr.rel (0) target = $region33
  $region32: #{basicblock_forward.8} parent=0 // pred_region
    _
  $region33: #{basicblock_forward.8} parent=0 // pred_fallthru
    _
  // Predicated region
  $region34: #{basicblock_forward.8} parent=0 // pred_check
    _
  $region35: #{basicblock_forward.8} parent=0 // pred_check_branch
    %330 = sbr.rel (0) target = $region37
  $region36: #{basicblock_forward.8} parent=0 // pred_region
    _
  $region37: #{basicblock_forward.8} parent=0 // pred_fallthru
    _

</llo_original>
